<compile_context>
chip_gen: v7x
topology: tpu7x:2x2x1
jax: 0.10.0
libtpu: 0.0.40
codegen_flags: <defaults>
</compile_context>

<pallas_src>
import jax
import jax.numpy as jnp
from jax.experimental import pallas as pl
from jax.experimental.pallas import tpu as pltpu


def _round_up(x, m):
    return ((x + m - 1) // m) * m


def _buf_bytes(shape, itemsize):
    """Conservative VMEM footprint of a buffer: (8, 128)-padded minor dims."""
    lead = 1
    for d in shape[:-2]:
        lead *= int(d)
    sub = _round_up(int(shape[-2]), 8)
    lane = _round_up(int(shape[-1]), 128)
    return lead * sub * lane * itemsize


def _vmem_estimate(Cin, Cout, TH, W, s_pad, x_itemsize, out_itemsize):
    """Per-step VMEM working set (double-buffered pipeline bufs + f32 temporaries)."""
    est = 0
    est += 2 * _buf_bytes((Cin, TH, W), x_itemsize)          # x row tile
    est += 2 * 2 * _buf_bytes((Cin, 1, W), x_itemsize)       # top/bottom halo rows
    est += 2 * 9 * Cin * 4 * 128                              # depthwise weights (approx.)
    est += 2 * _buf_bytes((Cout, Cin), 2)                     # pointwise weights (bf16)
    est += 2 * _buf_bytes((Cout, 1), 4)                       # fused bias
    est += 2 * _buf_bytes((Cout, s_pad), out_itemsize)        # output tile
    # in-kernel f32 temporaries: padded tile, 3 shifted views, acc, flat acc, matmul out
    est += _buf_bytes((Cin, TH + 2, W + 2), 4)
    est += 3 * _buf_bytes((Cin, TH + 2, W), 4)
    est += _buf_bytes((Cin, TH, W), 4)
    est += _buf_bytes((Cin, s_pad), 4)
    est += _buf_bytes((Cout, s_pad), 4)
    return est


def _choose_row_tile(N, Cin, Cout, H, W, x_itemsize, out_itemsize, budget):
    """Largest row tile TH (divisor of H, sublane-legal) whose working set fits the budget."""
    cands = [d for d in range(H, 0, -1) if H % d == 0 and (d % 8 == 0 or d == H)]
    lane_dense = [d for d in cands if (d * W) % 128 == 0]
    pool = lane_dense if lane_dense else cands

    def est(d):
        return _vmem_estimate(Cin, Cout, d, W, _round_up(d * W, 128),
                              x_itemsize, out_itemsize)

    fitting = [d for d in pool if est(d) <= budget]
    if not fitting:
        # TODO(synk): add a Cout/Cin grid axis so huge channel counts fit the budget.
        fitting = [pool[-1]]
    th = fitting[0]                      # largest tile that fits
    for d in fitting:                    # keep a few grid steps for megacore, but only
        if N * (H // d) >= 4 and d * W >= 512:   # while tiles stay >= 512 lanes wide
            th = d
            break
    return th


def _sepconv_kernel(xm_ref, xt_ref, xb_ref, dw_ref, pwt_ref, b_ref, o_ref):
    # xm_ref : (Cin, TH, W)      unpadded row tile of the input (NCHW)
    # xt_ref : (Cin, 1, W)       row above the tile (pre-zeroed at the top border)
    # xb_ref : (Cin, 1, W)       row below the tile (pre-zeroed at the bottom border)
    # dw_ref : (3, 3, Cin, 1, 1) depthwise weights
    # pwt_ref: (Cout, Cin)       pointwise weights, transposed, bf16
    # b_ref  : (Cout, 1)         fused bias (pw^T @ dw_b + pw_b), f32
    # o_ref  : (Cout, S_PAD)     one row tile of the flattened NCHW output
    Cin, TH, W = xm_ref.shape
    Cout, S_PAD = o_ref.shape
    S = TH * W

    xm = xm_ref[...].astype(jnp.float32)
    top = xt_ref[...].astype(jnp.float32)
    bot = xb_ref[...].astype(jnp.float32)

    # Assemble the zero-padded (Cin, TH+2, W+2) tile in VMEM: halo rows on the
    # sublane axis, zero border columns on the lane axis.
    xh = jnp.concatenate([top, xm, bot], axis=1)                      # (Cin, TH+2, W)
    zc = jnp.zeros((Cin, TH + 2, 1), jnp.float32)
    xp = jnp.concatenate([zc, xh, zc], axis=2)                        # (Cin, TH+2, W+2)

    # Three W-shifted views reused across kh (3 lane shifts instead of 9).
    xw = [xp[:, :, kw:kw + W] for kw in range(3)]

    # Depthwise 3x3 accumulation on the VPU, f32 taps (per-channel scalar broadcast).
    acc = jnp.zeros((Cin, TH, W), jnp.float32)
    for kh in range(3):
        for kw in range(3):
            tap = xw[kw][:, kh:kh + TH, :]                            # sublane-only slice
            acc = acc + tap * dw_ref[kh, kw].astype(jnp.float32)      # (Cin, 1, 1) weight

    # Pointwise 1x1 conv: (Cout, Cin) x (Cin, S_PAD) bf16 matmul on the MXU,
    # f32 accumulate; spatial axis on the lanes.
    acc2 = acc.reshape(Cin, S)
    if S_PAD != S:
        acc2 = jnp.concatenate(
            [acc2, jnp.zeros((Cin, S_PAD - S), jnp.float32)], axis=1)
    y = jnp.dot(pwt_ref[...], acc2.astype(jnp.bfloat16),
                preferred_element_type=jnp.float32)                   # (Cout, S_PAD)
    y = y + b_ref[...]
    o_ref[...] = y.astype(o_ref.dtype)


def separable_conv2d(x_nchw, dw_w, dw_b, pw_w, pw_b, *,
                     row_tile=None, vmem_budget_bytes=18 << 20):
    """x_nchw: (N, Cin, H, W); dw_w: (3,3,Cin); dw_b: (Cin,); pw_w: (Cin, Cout);
    pw_b: (Cout,).  Returns (N, Cout, H, W) NCHW, matching the PyTorch module."""
    N, Cin, H, W = x_nchw.shape
    Cout = pw_w.shape[1]
    out_dtype = x_nchw.dtype
    x_itemsize = jnp.dtype(x_nchw.dtype).itemsize
    out_itemsize = jnp.dtype(out_dtype).itemsize

    if row_tile is None:
        TH = _choose_row_tile(N, Cin, Cout, H, W, x_itemsize, out_itemsize,
                              vmem_budget_bytes)
    else:
        TH = int(row_tile)
    assert H % TH == 0 and (TH % 8 == 0 or TH == H), "illegal row tile"
    n_h = H // TH
    S = TH * W
    S_PAD = _round_up(S, 128)

    # 1-row top/bottom halos per row tile, pre-gathered (~2/TH of x extra HBM) and
    # pre-zeroed at the image borders; laid out (N, n_h, Cin, 1, W) so the kernel
    # block is full-extent in its last two dims.
    if n_h > 1:
        zrow = jnp.zeros((N, Cin, 1, W), x_nchw.dtype)
        top = jnp.concatenate([zrow, x_nchw[:, :, TH - 1:H - 1:TH, :]], axis=2)
        bot = jnp.concatenate([x_nchw[:, :, TH:H:TH, :], zrow], axis=2)
    else:
        top = jnp.zeros((N, Cin, 1, W), x_nchw.dtype)
        bot = jnp.zeros((N, Cin, 1, W), x_nchw.dtype)
    top = jnp.transpose(top, (0, 2, 1, 3)).reshape(N, n_h, Cin, 1, W)
    bot = jnp.transpose(bot, (0, 2, 1, 3)).reshape(N, n_h, Cin, 1, W)

    dw5 = dw_w.reshape(3, 3, Cin, 1, 1).astype(jnp.float32)
    pwt_f32 = jnp.transpose(pw_w, (1, 0)).astype(jnp.float32)          # (Cout, Cin)
    fused_b = (pwt_f32 @ dw_b.astype(jnp.float32)
               + pw_b.astype(jnp.float32)).reshape(Cout, 1)            # fold dw bias in
    pwt = pwt_f32.astype(jnp.bfloat16)                                 # MXU operand

    est = _vmem_estimate(Cin, Cout, TH, W, S_PAD, x_itemsize, out_itemsize)
    vmem_limit = int(min(56 << 20, max(8 << 20, 2 * est + (4 << 20))))

    flops = int(2 * N * H * W * Cin * (9 + Cout))
    bytes_accessed = int(x_nchw.size * x_itemsize + 2 * top.size * x_itemsize
                         + dw5.size * 4 + pwt.size * 2 + fused_b.size * 4
                         + N * Cout * n_h * S_PAD * out_itemsize)

    out_flat = pl.pallas_call(
        _sepconv_kernel,
        out_shape=jax.ShapeDtypeStruct((N, Cout, n_h * S_PAD), out_dtype),
        grid_spec=pltpu.PrefetchScalarGridSpec(
            num_scalar_prefetch=0,
            grid=(N, n_h),
            in_specs=[
                pl.BlockSpec((None, Cin, TH, W), lambda n, h: (n, 0, h, 0)),
                pl.BlockSpec((None, None, Cin, 1, W), lambda n, h: (n, h, 0, 0, 0)),
                pl.BlockSpec((None, None, Cin, 1, W), lambda n, h: (n, h, 0, 0, 0)),
                pl.BlockSpec((3, 3, Cin, 1, 1), lambda n, h: (0, 0, 0, 0, 0)),
                pl.BlockSpec((Cout, Cin), lambda n, h: (0, 0)),
                pl.BlockSpec((Cout, 1), lambda n, h: (0, 0)),
            ],
            out_specs=pl.BlockSpec((None, Cout, S_PAD), lambda n, h: (n, 0, h)),
        ),
        compiler_params=pltpu.CompilerParams(
            dimension_semantics=("parallel", "parallel"),
            vmem_limit_bytes=vmem_limit),
        cost_estimate=pl.CostEstimate(
            flops=flops, transcendentals=0, bytes_accessed=bytes_accessed),
    )(x_nchw, top, bot, dw5, pwt, fused_b)

    if S_PAD != S:  # drop the per-tile lane padding (only when TH*W % 128 != 0)
        out_flat = out_flat.reshape(N, Cout, n_h, S_PAD)[..., :S]
    # Metadata-only reshape: the flat layout is already NCHW row-major.
    return out_flat.reshape(N, Cout, H, W)


def _reference(x_nchw, dw_w, dw_b, pw_w, pw_b):
    """Pure-JAX reference (lax convs) for correctness checking."""
    N, Cin, H, W = x_nchw.shape
    Cout = pw_w.shape[1]
    dw_oihw = jnp.transpose(dw_w, (2, 0, 1))[:, None, :, :]
    y = jax.lax.conv_general_dilated(
        x_nchw, dw_oihw, window_strides=(1, 1), padding=((1, 1), (1, 1)),
        dimension_numbers=("NCHW", "OIHW", "NCHW"), feature_group_count=Cin)
    y = y + dw_b.reshape(1, Cin, 1, 1)
    pw_oihw = jnp.transpose(pw_w, (1, 0))[:, :, None, None]
    z = jax.lax.conv_general_dilated(
        y, pw_oihw, window_strides=(1, 1), padding=((0, 0), (0, 0)),
        dimension_numbers=("NCHW", "OIHW", "NCHW"))
    return z + pw_b.reshape(1, Cout, 1, 1)


if __name__ == "__main__":
    N, Cin, Cout, H, W = 2, 4, 8, 16, 16

    key = jax.random.PRNGKey(0)
    k_x, k_dw, k_db, k_pw, k_pb = jax.random.split(key, 5)

    x = jax.random.normal(k_x, (N, Cin, H, W), dtype=jnp.float32)
    # Depthwise conv params: PyTorch shape (Cin, 1, 3, 3) -> stored here as (3, 3, Cin).
    dw_w = jax.random.normal(k_dw, (3, 3, Cin), dtype=jnp.float32) * 0.1
    dw_b = jax.random.normal(k_db, (Cin,), dtype=jnp.float32) * 0.1
    # Pointwise conv params: PyTorch shape (Cout, Cin, 1, 1) -> stored here as (Cin, Cout).
    pw_w = jax.random.normal(k_pw, (Cin, Cout), dtype=jnp.float32) * 0.1
    pw_b = jax.random.normal(k_pb, (Cout,), dtype=jnp.float32) * 0.1

    ref = _reference(x, dw_w, dw_b, pw_w, pw_b)

    # Default tiling (single row tile here).  Tolerance reflects the bf16 MXU matmul.
    out = separable_conv2d(x, dw_w, dw_b, pw_w, pw_b)
    jax.block_until_ready(out)
    assert out.shape == (N, Cout, H, W)
    assert jnp.allclose(out, ref, atol=1e-2, rtol=1e-2), \
        float(jnp.max(jnp.abs(out - ref)))

    # Explicitly exercise the multi-row-tile halo path (TH=8 -> 2 tiles per image).
    out2 = separable_conv2d(x, dw_w, dw_b, pw_w, pw_b, row_tile=8)
    jax.block_until_ready(out2)
    assert jnp.allclose(out2, ref, atol=1e-2, rtol=1e-2), \
        float(jnp.max(jnp.abs(out2 - ref)))

    print("KERNEL_OK")
</pallas_src>

<mosaic_0001>
module attributes {stable_mosaic.version = 11 : i64} {
  func.func @_sepconv_kernel(%arg0: i32, %arg1: i32, %arg2: memref<1x4x16x16xf32, #tpu.memory_space<vmem>>, %arg3: memref<1x1x4x1x16xf32, #tpu.memory_space<vmem>>, %arg4: memref<1x1x4x1x16xf32, #tpu.memory_space<vmem>>, %arg5: memref<3x3x4x1x1xf32, #tpu.memory_space<vmem>>, %arg6: memref<8x4xbf16, #tpu.memory_space<vmem>>, %arg7: memref<8x1xf32, #tpu.memory_space<vmem>>, %arg8: memref<1x8x256xf32, #tpu.memory_space<vmem>>) attributes {dimension_semantics = [#tpu.dimension_semantics<parallel>, #tpu.dimension_semantics<parallel>], iteration_bounds = array<i64: 2, 1>, scalar_prefetch = 0 : i64, scratch_operands = 0 : i64, tpu.core_type = #tpu.core_type<tc>, window_params = [{transform_indices = @transform_0, window_bounds = array<i64: 1, 4, 16, 16>}, {transform_indices = @transform_1, window_bounds = array<i64: 1, 1, 4, 1, 16>}, {transform_indices = @transform_2, window_bounds = array<i64: 1, 1, 4, 1, 16>}, {pipeline_mode = #tpu.pipeline_mode<synchronous>, transform_indices = @transform_3, window_bounds = array<i64: 3, 3, 4, 1, 1>}, {pipeline_mode = #tpu.pipeline_mode<synchronous>, transform_indices = @transform_4, window_bounds = array<i64: 8, 4>}, {pipeline_mode = #tpu.pipeline_mode<synchronous>, transform_indices = @transform_5, window_bounds = array<i64: 8, 1>}, {transform_indices = @transform_6, window_bounds = array<i64: 1, 8, 256>}]} {
    %c0 = arith.constant 0 : index
    %c0_0 = arith.constant 0 : index
    %c0_1 = arith.constant 0 : index
    %c0_2 = arith.constant 0 : index
    %0 = vector.load %arg2[%c0, %c0_0, %c0_1, %c0_2] : memref<1x4x16x16xf32, #tpu.memory_space<vmem>>, vector<1x4x16x16xf32>
    %1 = vector.shape_cast %0 : vector<1x4x16x16xf32> to vector<4x16x16xf32>
    %c0_3 = arith.constant 0 : index
    %c0_4 = arith.constant 0 : index
    %c0_5 = arith.constant 0 : index
    %c0_6 = arith.constant 0 : index
    %c0_7 = arith.constant 0 : index
    %2 = vector.load %arg3[%c0_3, %c0_4, %c0_5, %c0_6, %c0_7] : memref<1x1x4x1x16xf32, #tpu.memory_space<vmem>>, vector<1x1x4x1x16xf32>
    %3 = vector.shape_cast %2 : vector<1x1x4x1x16xf32> to vector<4x1x16xf32>
    %c0_8 = arith.constant 0 : index
    %c0_9 = arith.constant 0 : index
    %c0_10 = arith.constant 0 : index
    %c0_11 = arith.constant 0 : index
    %c0_12 = arith.constant 0 : index
    %4 = vector.load %arg4[%c0_8, %c0_9, %c0_10, %c0_11, %c0_12] : memref<1x1x4x1x16xf32, #tpu.memory_space<vmem>>, vector<1x1x4x1x16xf32>
    %5 = vector.shape_cast %4 : vector<1x1x4x1x16xf32> to vector<4x1x16xf32>
    %6 = tpu.concatenate %3, %1, %5 in 1 : vector<4x1x16xf32>, vector<4x16x16xf32>, vector<4x1x16xf32> -> vector<4x18x16xf32>
    %cst = arith.constant 0.000000e+00 : f32
    %7 = vector.broadcast %cst : f32 to vector<4x18x1xf32>
    %8 = tpu.concatenate %7, %6, %7 in 2 : vector<4x18x1xf32>, vector<4x18x16xf32>, vector<4x18x1xf32> -> vector<4x18x18xf32>
    %9 = vector.extract_strided_slice %8 {offsets = [0, 0, 0], sizes = [4, 18, 16], strides = [1, 1, 1]} : vector<4x18x18xf32> to vector<4x18x16xf32>
    %10 = vector.extract_strided_slice %8 {offsets = [0, 0, 1], sizes = [4, 18, 16], strides = [1, 1, 1]} : vector<4x18x18xf32> to vector<4x18x16xf32>
    %11 = vector.extract_strided_slice %8 {offsets = [0, 0, 2], sizes = [4, 18, 16], strides = [1, 1, 1]} : vector<4x18x18xf32> to vector<4x18x16xf32>
    %cst_13 = arith.constant 0.000000e+00 : f32
    %12 = vector.broadcast %cst_13 : f32 to vector<4x16x16xf32>
    %13 = vector.extract_strided_slice %9 {offsets = [0, 0, 0], sizes = [4, 16, 16], strides = [1, 1, 1]} : vector<4x18x16xf32> to vector<4x16x16xf32>
    %c0_14 = arith.constant 0 : index
    %c0_15 = arith.constant 0 : index
    %c0_16 = arith.constant 0 : index
    %c0_17 = arith.constant 0 : index
    %c0_18 = arith.constant 0 : index
    %14 = vector.load %arg5[%c0_14, %c0_15, %c0_16, %c0_17, %c0_18] : memref<3x3x4x1x1xf32, #tpu.memory_space<vmem>>, vector<1x1x4x1x1xf32>
    %15 = vector.shape_cast %14 : vector<1x1x4x1x1xf32> to vector<4x1x1xf32>
    %16 = vector.broadcast %15 : vector<4x1x1xf32> to vector<4x16x16xf32>
    %17 = arith.mulf %13, %16 : vector<4x16x16xf32>
    %18 = arith.addf %12, %17 : vector<4x16x16xf32>
    %19 = vector.extract_strided_slice %10 {offsets = [0, 0, 0], sizes = [4, 16, 16], strides = [1, 1, 1]} : vector<4x18x16xf32> to vector<4x16x16xf32>
    %c0_19 = arith.constant 0 : index
    %c1 = arith.constant 1 : index
    %c0_20 = arith.constant 0 : index
    %c0_21 = arith.constant 0 : index
    %c0_22 = arith.constant 0 : index
    %20 = vector.load %arg5[%c0_19, %c1, %c0_20, %c0_21, %c0_22] : memref<3x3x4x1x1xf32, #tpu.memory_space<vmem>>, vector<1x1x4x1x1xf32>
    %21 = vector.shape_cast %20 : vector<1x1x4x1x1xf32> to vector<4x1x1xf32>
    %22 = vector.broadcast %21 : vector<4x1x1xf32> to vector<4x16x16xf32>
    %23 = arith.mulf %19, %22 : vector<4x16x16xf32>
    %24 = arith.addf %18, %23 : vector<4x16x16xf32>
    %25 = vector.extract_strided_slice %11 {offsets = [0, 0, 0], sizes = [4, 16, 16], strides = [1, 1, 1]} : vector<4x18x16xf32> to vector<4x16x16xf32>
    %c0_23 = arith.constant 0 : index
    %c2 = arith.constant 2 : index
    %c0_24 = arith.constant 0 : index
    %c0_25 = arith.constant 0 : index
    %c0_26 = arith.constant 0 : index
    %26 = vector.load %arg5[%c0_23, %c2, %c0_24, %c0_25, %c0_26] : memref<3x3x4x1x1xf32, #tpu.memory_space<vmem>>, vector<1x1x4x1x1xf32>
    %27 = vector.shape_cast %26 : vector<1x1x4x1x1xf32> to vector<4x1x1xf32>
    %28 = vector.broadcast %27 : vector<4x1x1xf32> to vector<4x16x16xf32>
    %29 = arith.mulf %25, %28 : vector<4x16x16xf32>
    %30 = arith.addf %24, %29 : vector<4x16x16xf32>
    %31 = vector.extract_strided_slice %9 {offsets = [0, 1, 0], sizes = [4, 16, 16], strides = [1, 1, 1]} : vector<4x18x16xf32> to vector<4x16x16xf32>
    %c1_27 = arith.constant 1 : index
    %c0_28 = arith.constant 0 : index
    %c0_29 = arith.constant 0 : index
    %c0_30 = arith.constant 0 : index
    %c0_31 = arith.constant 0 : index
    %32 = vector.load %arg5[%c1_27, %c0_28, %c0_29, %c0_30, %c0_31] : memref<3x3x4x1x1xf32, #tpu.memory_space<vmem>>, vector<1x1x4x1x1xf32>
    %33 = vector.shape_cast %32 : vector<1x1x4x1x1xf32> to vector<4x1x1xf32>
    %34 = vector.broadcast %33 : vector<4x1x1xf32> to vector<4x16x16xf32>
    %35 = arith.mulf %31, %34 : vector<4x16x16xf32>
    %36 = arith.addf %30, %35 : vector<4x16x16xf32>
    %37 = vector.extract_strided_slice %10 {offsets = [0, 1, 0], sizes = [4, 16, 16], strides = [1, 1, 1]} : vector<4x18x16xf32> to vector<4x16x16xf32>
    %c1_32 = arith.constant 1 : index
    %c1_33 = arith.constant 1 : index
    %c0_34 = arith.constant 0 : index
    %c0_35 = arith.constant 0 : index
    %c0_36 = arith.constant 0 : index
    %38 = vector.load %arg5[%c1_32, %c1_33, %c0_34, %c0_35, %c0_36] : memref<3x3x4x1x1xf32, #tpu.memory_space<vmem>>, vector<1x1x4x1x1xf32>
    %39 = vector.shape_cast %38 : vector<1x1x4x1x1xf32> to vector<4x1x1xf32>
    %40 = vector.broadcast %39 : vector<4x1x1xf32> to vector<4x16x16xf32>
    %41 = arith.mulf %37, %40 : vector<4x16x16xf32>
    %42 = arith.addf %36, %41 : vector<4x16x16xf32>
    %43 = vector.extract_strided_slice %11 {offsets = [0, 1, 0], sizes = [4, 16, 16], strides = [1, 1, 1]} : vector<4x18x16xf32> to vector<4x16x16xf32>
    %c1_37 = arith.constant 1 : index
    %c2_38 = arith.constant 2 : index
    %c0_39 = arith.constant 0 : index
    %c0_40 = arith.constant 0 : index
    %c0_41 = arith.constant 0 : index
    %44 = vector.load %arg5[%c1_37, %c2_38, %c0_39, %c0_40, %c0_41] : memref<3x3x4x1x1xf32, #tpu.memory_space<vmem>>, vector<1x1x4x1x1xf32>
    %45 = vector.shape_cast %44 : vector<1x1x4x1x1xf32> to vector<4x1x1xf32>
    %46 = vector.broadcast %45 : vector<4x1x1xf32> to vector<4x16x16xf32>
    %47 = arith.mulf %43, %46 : vector<4x16x16xf32>
    %48 = arith.addf %42, %47 : vector<4x16x16xf32>
    %49 = vector.extract_strided_slice %9 {offsets = [0, 2, 0], sizes = [4, 16, 16], strides = [1, 1, 1]} : vector<4x18x16xf32> to vector<4x16x16xf32>
    %c2_42 = arith.constant 2 : index
    %c0_43 = arith.constant 0 : index
    %c0_44 = arith.constant 0 : index
    %c0_45 = arith.constant 0 : index
    %c0_46 = arith.constant 0 : index
    %50 = vector.load %arg5[%c2_42, %c0_43, %c0_44, %c0_45, %c0_46] : memref<3x3x4x1x1xf32, #tpu.memory_space<vmem>>, vector<1x1x4x1x1xf32>
    %51 = vector.shape_cast %50 : vector<1x1x4x1x1xf32> to vector<4x1x1xf32>
    %52 = vector.broadcast %51 : vector<4x1x1xf32> to vector<4x16x16xf32>
    %53 = arith.mulf %49, %52 : vector<4x16x16xf32>
    %54 = arith.addf %48, %53 : vector<4x16x16xf32>
    %55 = vector.extract_strided_slice %10 {offsets = [0, 2, 0], sizes = [4, 16, 16], strides = [1, 1, 1]} : vector<4x18x16xf32> to vector<4x16x16xf32>
    %c2_47 = arith.constant 2 : index
    %c1_48 = arith.constant 1 : index
    %c0_49 = arith.constant 0 : index
    %c0_50 = arith.constant 0 : index
    %c0_51 = arith.constant 0 : index
    %56 = vector.load %arg5[%c2_47, %c1_48, %c0_49, %c0_50, %c0_51] : memref<3x3x4x1x1xf32, #tpu.memory_space<vmem>>, vector<1x1x4x1x1xf32>
    %57 = vector.shape_cast %56 : vector<1x1x4x1x1xf32> to vector<4x1x1xf32>
    %58 = vector.broadcast %57 : vector<4x1x1xf32> to vector<4x16x16xf32>
    %59 = arith.mulf %55, %58 : vector<4x16x16xf32>
    %60 = arith.addf %54, %59 : vector<4x16x16xf32>
    %61 = vector.extract_strided_slice %11 {offsets = [0, 2, 0], sizes = [4, 16, 16], strides = [1, 1, 1]} : vector<4x18x16xf32> to vector<4x16x16xf32>
    %c2_52 = arith.constant 2 : index
    %c2_53 = arith.constant 2 : index
    %c0_54 = arith.constant 0 : index
    %c0_55 = arith.constant 0 : index
    %c0_56 = arith.constant 0 : index
    %62 = vector.load %arg5[%c2_52, %c2_53, %c0_54, %c0_55, %c0_56] : memref<3x3x4x1x1xf32, #tpu.memory_space<vmem>>, vector<1x1x4x1x1xf32>
    %63 = vector.shape_cast %62 : vector<1x1x4x1x1xf32> to vector<4x1x1xf32>
    %64 = vector.broadcast %63 : vector<4x1x1xf32> to vector<4x16x16xf32>
    %65 = arith.mulf %61, %64 : vector<4x16x16xf32>
    %66 = arith.addf %60, %65 : vector<4x16x16xf32>
    %67 = vector.shape_cast %66 : vector<4x16x16xf32> to vector<4x256xf32>
    %c0_57 = arith.constant 0 : index
    %c0_58 = arith.constant 0 : index
    %68 = vector.load %arg6[%c0_57, %c0_58] : memref<8x4xbf16, #tpu.memory_space<vmem>>, vector<8x4xbf16>
    %69 = arith.truncf %67 : vector<4x256xf32> to vector<4x256xbf16>
    %cst_59 = arith.constant dense<0.000000e+00> : vector<8x256xf32>
    %70 = tpu.matmul %68, %69, %cst_59 {dimension_numbers = #tpu.dot_dimension_numbers<[1], [0], [0], [1], [0, 0, 1, 1], [], []>} : vector<8x4xbf16>, vector<4x256xbf16>, vector<8x256xf32> -> vector<8x256xf32>
    %c0_60 = arith.constant 0 : index
    %c0_61 = arith.constant 0 : index
    %71 = vector.load %arg7[%c0_60, %c0_61] : memref<8x1xf32, #tpu.memory_space<vmem>>, vector<8x1xf32>
    %72 = vector.broadcast %71 : vector<8x1xf32> to vector<8x256xf32>
    %73 = arith.addf %70, %72 : vector<8x256xf32>
    %c0_62 = arith.constant 0 : index
    %c0_63 = arith.constant 0 : index
    %c0_64 = arith.constant 0 : index
    %74 = vector.load %arg8[%c0_62, %c0_63, %c0_64] : memref<1x8x256xf32, #tpu.memory_space<vmem>>, vector<1x8x256xf32>
    %75 = vector.shape_cast %74 : vector<1x8x256xf32> to vector<8x256xf32>
    %76 = vector.shape_cast %73 : vector<8x256xf32> to vector<1x8x256xf32>
    tpu.vector_store %arg8[%c0_62, %c0_63, %c0_64], %76 {strides = array<i32>} : memref<1x8x256xf32, #tpu.memory_space<vmem>>, vector<1x8x256xf32>,
    return
  }
  func.func @transform_0(%arg0: i32, %arg1: i32) -> (i32, i32, i32, i32) {
    %c0_i32 = arith.constant 0 : i32
    %c0_i32_0 = arith.constant 0 : i32
    %c0_i32_1 = arith.constant 0 : i32
    return %arg0, %c0_i32, %arg1, %c0_i32_0 : i32, i32, i32, i32
  }
  func.func @transform_1(%arg0: i32, %arg1: i32) -> (i32, i32, i32, i32, i32) {
    %c0_i32 = arith.constant 0 : i32
    %c0_i32_0 = arith.constant 0 : i32
    %c0_i32_1 = arith.constant 0 : i32
    %c0_i32_2 = arith.constant 0 : i32
    return %arg0, %arg1, %c0_i32, %c0_i32_0, %c0_i32_1 : i32, i32, i32, i32, i32
  }
  func.func @transform_2(%arg0: i32, %arg1: i32) -> (i32, i32, i32, i32, i32) {
    %c0_i32 = arith.constant 0 : i32
    %c0_i32_0 = arith.constant 0 : i32
    %c0_i32_1 = arith.constant 0 : i32
    %c0_i32_2 = arith.constant 0 : i32
    return %arg0, %arg1, %c0_i32, %c0_i32_0, %c0_i32_1 : i32, i32, i32, i32, i32
  }
  func.func @transform_3(%arg0: i32, %arg1: i32) -> (i32, i32, i32, i32, i32) {
    %c0_i32 = arith.constant 0 : i32
    %c0_i32_0 = arith.constant 0 : i32
    %c0_i32_1 = arith.constant 0 : i32
    %c0_i32_2 = arith.constant 0 : i32
    %c0_i32_3 = arith.constant 0 : i32
    %c0_i32_4 = arith.constant 0 : i32
    return %c0_i32, %c0_i32_0, %c0_i32_1, %c0_i32_2, %c0_i32_3 : i32, i32, i32, i32, i32
  }
  func.func @transform_4(%arg0: i32, %arg1: i32) -> (i32, i32) {
    %c0_i32 = arith.constant 0 : i32
    %c0_i32_0 = arith.constant 0 : i32
    %c0_i32_1 = arith.constant 0 : i32
    return %c0_i32, %c0_i32_0 : i32, i32
  }
  func.func @transform_5(%arg0: i32, %arg1: i32) -> (i32, i32) {
    %c0_i32 = arith.constant 0 : i32
    %c0_i32_0 = arith.constant 0 : i32
    %c0_i32_1 = arith.constant 0 : i32
    return %c0_i32, %c0_i32_0 : i32, i32
  }
  func.func @transform_6(%arg0: i32, %arg1: i32) -> (i32, i32, i32) {
    %c0_i32 = arith.constant 0 : i32
    %c0_i32_0 = arith.constant 0 : i32
    return %arg0, %c0_i32, %arg1 : i32, i32, i32
  }
}

</mosaic_0001>

<llo_original>
// kernel: tpu_custom_call.1
$region0: #{tpu_custom_call.1}
  #allocation0 [shape = 'u32[]', space=smem, size = 0x4, offset = 0x4, fixed_abs, tag = 'smem constant byte address 0x4 - core index']
  #allocation1 [shape = 'u32[144,128]{1,0:T(1,128)}', space=vmem, size = 0x12000, scoped, tag = 'internal scratch']
  %s0 = inlined_call_operand.hbm [shape: f32[2,4,16,16], index: 0, kind: input, shape index: {}]
  %s1 = inlined_call_operand.vmem [shape: f32[2,1,4,1,16], index: 1, kind: input, shape index: {}]
  %s2 = inlined_call_operand.vmem [shape: f32[2,1,4,1,16], index: 2, kind: input, shape index: {}]
  %s3 = inlined_call_operand.vmem [shape: f32[3,3,4,1,1], index: 3, kind: input, shape index: {}]
  %s4 = inlined_call_operand.vmem [shape: bf16[8,4], index: 4, kind: input, shape index: {}]
  %s5 = inlined_call_operand.vmem [shape: f32[8,1], index: 5, kind: input, shape index: {}]
  %s6 = inlined_call_operand.hbm [shape: f32[2,8,256], index: 6, kind: output, shape index: {}]
  %s7 = sld [smem:[#allocation0]]
  $region61: #{tpu_custom_call.1} parent=0
    _
  %s9 = ssub.s32 1, %s7
  %s10 = scalar_select 0, %s9, %s7
  $region1: #{tpu_custom_call.1} parent=0
    #allocation2 [shape = 'u8[65536]{0}', space=vmem, size = 0x10000, scoped, tag = 'input window, operand 0']
    #allocation3 [shape = 's32[2]{0}', space=sflag, size = 0x8, scoped, tag = 'scoped memory for tpu_custom_call.1']
    #allocation4 [shape = 's32[2]{0}', space=sflag, size = 0x8, scoped, tag = 'scoped memory for tpu_custom_call.1']
    #allocation5 [shape = 'u8[16384]{0}', space=vmem, size = 0x4000, scoped, tag = 'output window, operand 0']
    %11 = vsyncpa [#allocation3], 0
    %s12 = scalar_lea.sflag [#allocation3], 1
    %13 = vsyncpa %s12, 0
    %14 = vsyncpa [#allocation4], 0
    %s15 = scalar_lea.sflag [#allocation4], 1
    %16 = vsyncpa %s15, 0
    loop: start=0, step=1, limit=4
    $region2: #{tpu_custom_call.1} parent=1 // loop_pre_header
      _
    $region3: #{tpu_custom_call.1} parent=1 // loop_header
      %s18 = sphi 0, %s22
      %p19 = scmp.ge.s32.totalorder %s18, 4
      %s25 = sphi 0, %s37
      %s26 = sphi 0, %s33
      %s27 = sphi 0, %s25
      %s28 = sphi 0, %s26
      %s29 = sphi 0, %s27
      %s30 = sphi 0, %s28
      %s42 = sphi 0, %s44
      %s45 = sphi 0, %s42
      %s46 = sphi 0, %s45
      %s62 = sphi 0, %s46
      %s70 = sphi 0, %s72
      %s73 = sphi 0, %s70
      %s74 = sphi 0, %s73
      %s90 = sphi 0, %s74
      %s98 = sphi 0, %s100
      %s101 = sphi 0, %s98
      %s102 = sphi 0, %s101
      %s118 = sphi 0, %s102
      %s122 = sphi 0, %s122
      %s124 = sphi 0, %s122
      %s125 = sphi 0, %s124
      %s139 = sphi 0, %s125
      %s143 = sphi 0, %s143
      %s145 = sphi 0, %s143
      %s146 = sphi 0, %s145
      %s160 = sphi 0, %s146
      %s164 = sphi 0, %s164
      %s166 = sphi 0, %s164
      %s167 = sphi 0, %s166
      %s181 = sphi 0, %s167
      %s189 = sphi 0, %s191
      %s192 = sphi 0, %s189
      %s193 = sphi 0, %s192
      %s209 = sphi 0, %s193
    $region4: #{tpu_custom_call.1} parent=1 // loop_header_branch
      %21 = sbr.rel (%p19) target = $region8
    $region5: #{tpu_custom_call.1} parent=1 // loop_body
      %s23 = ssub.s32 %s18, 1
      %s24 = ssub.s32 %s18, 2
      %s31 = sadd.s32 1, %s26
      %p32 = scmp.ge.s32.totalorder %s31, 1
      %s33 = scalar_select %p32, 0, %s31
      %s34 = sadd.s32 1, %s25
      %s35 = scalar_select %p32, %s34, %s25
      %p36 = scmp.ge.s32.totalorder %s35, 2
      %s37 = scalar_select %p36, 0, %s35
      %s38 = ssub.s32 %s25, %s37
      %s39 = ssub.s32 %s26, %s33
      %s40 = sor.u32 %s38, %s39
      %p41 = scmp.eq.s32.totalorder %s40, 0
      %s43 = sadd.s32 %s42, 1
      %s44 = scalar_select %p41, %s42, %s43
      %p47 = pneg %p41
      %p48 = scmp.eq.s32.totalorder %s18, 1
      %p49 = por %p47, %p48
      %p50 = scmp.ne.s32.totalorder %s42, %s45
      %p51 = scmp.eq.s32.totalorder %s18, 0
      %p52 = por %p50, %p51
      %p53 = scmp.ne.s32.totalorder %s42, %s45
      %p54 = scmp.eq.s32.totalorder %s23, 1
      %p55 = por %p53, %p54
      %p56 = scmp.ne.s32.totalorder %s45, %s46
      %p57 = scmp.eq.s32.totalorder %s23, 0
      %p58 = por %p56, %p57
      %p59 = scmp.ne.s32.totalorder %s45, %s46
      %p60 = scmp.eq.s32.totalorder %s24, 1
      %p61 = por %p59, %p60
      %p63 = scmp.ne.s32.totalorder %s46, %s62
      %p64 = scmp.eq.s32.totalorder %s24, 0
      %p65 = por %p63, %p64
      %s66 = ssub.s32 %s25, %s37
      %s67 = ssub.s32 %s26, %s33
      %s68 = sor.u32 %s66, %s67
      %p69 = scmp.eq.s32.totalorder %s68, 0
      %s71 = sadd.s32 %s70, 1
      %s72 = scalar_select %p69, %s70, %s71
      %p75 = pneg %p69
      %p76 = scmp.eq.s32.totalorder %s18, 1
      %p77 = por %p75, %p76
      %p78 = scmp.ne.s32.totalorder %s70, %s73
      %p79 = scmp.eq.s32.totalorder %s18, 0
      %p80 = por %p78, %p79
      %p81 = scmp.ne.s32.totalorder %s70, %s73
      %p82 = scmp.eq.s32.totalorder %s23, 1
      %p83 = por %p81, %p82
      %p84 = scmp.ne.s32.totalorder %s73, %s74
      %p85 = scmp.eq.s32.totalorder %s23, 0
      %p86 = por %p84, %p85
      %p87 = scmp.ne.s32.totalorder %s73, %s74
      %p88 = scmp.eq.s32.totalorder %s24, 1
      %p89 = por %p87, %p88
      %p91 = scmp.ne.s32.totalorder %s74, %s90
      %p92 = scmp.eq.s32.totalorder %s24, 0
      %p93 = por %p91, %p92
      %s94 = ssub.s32 %s25, %s37
      %s95 = ssub.s32 %s26, %s33
      %s96 = sor.u32 %s94, %s95
      %p97 = scmp.eq.s32.totalorder %s96, 0
      %s99 = sadd.s32 %s98, 1
      %s100 = scalar_select %p97, %s98, %s99
      %p103 = pneg %p97
      %p104 = scmp.eq.s32.totalorder %s18, 1
      %p105 = por %p103, %p104
      %p106 = scmp.ne.s32.totalorder %s98, %s101
      %p107 = scmp.eq.s32.totalorder %s18, 0
      %p108 = por %p106, %p107
      %p109 = scmp.ne.s32.totalorder %s98, %s101
      %p110 = scmp.eq.s32.totalorder %s23, 1
      %p111 = por %p109, %p110
      %p112 = scmp.ne.s32.totalorder %s101, %s102
      %p113 = scmp.eq.s32.totalorder %s23, 0
      %p114 = por %p112, %p113
      %p115 = scmp.ne.s32.totalorder %s101, %s102
      %p116 = scmp.eq.s32.totalorder %s24, 1
      %p117 = por %p115, %p116
      %p119 = scmp.ne.s32.totalorder %s102, %s118
      %p120 = scmp.eq.s32.totalorder %s24, 0
      %p121 = por %p119, %p120
      %s123 = sadd.s32 %s122, 1
      %p126 = scmp.eq.s32.totalorder %s18, 1
      %p127 = scmp.ne.s32.totalorder %s122, %s124
      %p128 = scmp.eq.s32.totalorder %s18, 0
      %p129 = por %p127, %p128
      %p130 = scmp.ne.s32.totalorder %s122, %s124
      %p131 = scmp.eq.s32.totalorder %s23, 1
      %p132 = por %p130, %p131
      %p133 = scmp.ne.s32.totalorder %s124, %s125
      %p134 = scmp.eq.s32.totalorder %s23, 0
      %p135 = por %p133, %p134
      %p136 = scmp.ne.s32.totalorder %s124, %s125
      %p137 = scmp.eq.s32.totalorder %s24, 1
      %p138 = por %p136, %p137
      %p140 = scmp.ne.s32.totalorder %s125, %s139
      %p141 = scmp.eq.s32.totalorder %s24, 0
      %p142 = por %p140, %p141
      %s144 = sadd.s32 %s143, 1
      %p147 = scmp.eq.s32.totalorder %s18, 1
      %p148 = scmp.ne.s32.totalorder %s143, %s145
      %p149 = scmp.eq.s32.totalorder %s18, 0
      %p150 = por %p148, %p149
      %p151 = scmp.ne.s32.totalorder %s143, %s145
      %p152 = scmp.eq.s32.totalorder %s23, 1
      %p153 = por %p151, %p152
      %p154 = scmp.ne.s32.totalorder %s145, %s146
      %p155 = scmp.eq.s32.totalorder %s23, 0
      %p156 = por %p154, %p155
      %p157 = scmp.ne.s32.totalorder %s145, %s146
      %p158 = scmp.eq.s32.totalorder %s24, 1
      %p159 = por %p157, %p158
      %p161 = scmp.ne.s32.totalorder %s146, %s160
      %p162 = scmp.eq.s32.totalorder %s24, 0
      %p163 = por %p161, %p162
      %s165 = sadd.s32 %s164, 1
      %p168 = scmp.eq.s32.totalorder %s18, 1
      %p169 = scmp.ne.s32.totalorder %s164, %s166
      %p170 = scmp.eq.s32.totalorder %s18, 0
      %p171 = por %p169, %p170
      %p172 = scmp.ne.s32.totalorder %s164, %s166
      %p173 = scmp.eq.s32.totalorder %s23, 1
      %p174 = por %p172, %p173
      %p175 = scmp.ne.s32.totalorder %s166, %s167
      %p176 = scmp.eq.s32.totalorder %s23, 0
      %p177 = por %p175, %p176
      %p178 = scmp.ne.s32.totalorder %s166, %s167
      %p179 = scmp.eq.s32.totalorder %s24, 1
      %p180 = por %p178, %p179
      %p182 = scmp.ne.s32.totalorder %s167, %s181
      %p183 = scmp.eq.s32.totalorder %s24, 0
      %p184 = por %p182, %p183
      %s185 = ssub.s32 %s25, %s37
      %s186 = ssub.s32 %s26, %s33
      %s187 = sor.u32 %s185, %s186
      %p188 = scmp.eq.s32.totalorder %s187, 0
      %s190 = sadd.s32 %s189, 1
      %s191 = scalar_select %p188, %s189, %s190
      %p194 = pneg %p188
      %p195 = scmp.eq.s32.totalorder %s18, 1
      %p196 = por %p194, %p195
      %p197 = scmp.ne.s32.totalorder %s189, %s192
      %p198 = scmp.eq.s32.totalorder %s18, 0
      %p199 = por %p197, %p198
      %p200 = scmp.ne.s32.totalorder %s189, %s192
      %p201 = scmp.eq.s32.totalorder %s23, 1
      %p202 = por %p200, %p201
      %p203 = scmp.ne.s32.totalorder %s192, %s193
      %p204 = scmp.eq.s32.totalorder %s23, 0
      %p205 = por %p203, %p204
      %p206 = scmp.ne.s32.totalorder %s192, %s193
      %p207 = scmp.eq.s32.totalorder %s24, 1
      %p208 = por %p206, %p207
      %p210 = scmp.ne.s32.totalorder %s193, %s209
      %p211 = scmp.eq.s32.totalorder %s24, 0
      %p212 = por %p210, %p211
      %p213 = scmp.le.s32.totalorder 1, %s18
      %p214 = scmp.lt.s32.totalorder %s18, 3
      %p215 = pnand %p213, %p214
      %p216 = pneg %p215
      // Predicated region
      $region9: #{tpu_custom_call.1} parent=5 // pred_check
        _
      $region10: #{tpu_custom_call.1} parent=5 // pred_check_branch
        %218 = sbr.rel (%p215) target = $region12
      $region11: #{tpu_custom_call.1} parent=5 // pred_region
        %s219 = ssub.s32 %s18, 1
        // Predicated region
        $region13: #{tpu_custom_call.1} parent=11 // pred_check
          %p220 = pneg %p135
        $region14: #{tpu_custom_call.1} parent=11 // pred_check_branch
          %222 = sbr.rel (%p220) target = $region16
        $region15: #{tpu_custom_call.1} parent=11 // pred_region
          _
        $region16: #{tpu_custom_call.1} parent=11 // pred_fallthru
          _
        // Predicated region
        $region17: #{tpu_custom_call.1} parent=11 // pred_check
          %p223 = pneg %p156
        $region18: #{tpu_custom_call.1} parent=11 // pred_check_branch
          %225 = sbr.rel (%p223) target = $region20
        $region19: #{tpu_custom_call.1} parent=11 // pred_region
          _
        $region20: #{tpu_custom_call.1} parent=11 // pred_fallthru
          _
        // Predicated region
        $region21: #{tpu_custom_call.1} parent=11 // pred_check
          %p226 = pneg %p177
        $region22: #{tpu_custom_call.1} parent=11 // pred_check_branch
          %228 = sbr.rel (%p226) target = $region24
        $region23: #{tpu_custom_call.1} parent=11 // pred_region
          _
        $region24: #{tpu_custom_call.1} parent=11 // pred_fallthru
          _
      $region12: #{tpu_custom_call.1} parent=5 // pred_fallthru
        _
      %p229 = scmp.lt.s32.totalorder %s18, 2
      // Predicated region
      $region25: #{tpu_custom_call.1} parent=5 // pred_check
        %p230 = pneg %p229
      $region26: #{tpu_custom_call.1} parent=5 // pred_check_branch
        %232 = sbr.rel (%p230) target = $region28
      $region27: #{tpu_custom_call.1} parent=5 // pred_region
        // Predicated region
        $region29: #{tpu_custom_call.1} parent=27 // pred_check
          %p233 = pneg %p52
        $region30: #{tpu_custom_call.1} parent=27 // pred_check_branch
          %235 = sbr.rel (%p233) target = $region32
        $region31: #{tpu_custom_call.1} parent=27 // pred_region
          %s236 = sand.u32 %s42, 1
          %s237 = scalar_lea.sflag [#allocation3], %s236
          %s238 = sand.u32 %s42, 1
          %s239 = smul.addr %s238, 64
          %s240 = scalar_lea.vmem [#allocation2], %s239
          %s241 = smul.u32 2, %s26
          %s243 = ssub.s32 1024, 1024
          %244 = vsyncadd %s237, %s243
          %s245 = smul.addr %s25, 8
          %s246 = sadd.s32 %s241, %s245
          %s247 = smul.addr %s246, 128
          %s248 = scalar_lea.hbm %s0, %s247
          %s249 = sshll.u32 %s240, 4
          %s250 = int_to_ptr.vmem [resolvable:$true] %s249
          %255 = dma.hbm_to_vmem [thread:$0]  %s248, 1024, %s250, %s237, 128, 128, 8
        $region32: #{tpu_custom_call.1} parent=27 // pred_fallthru
          _
        // Predicated region
        $region33: #{tpu_custom_call.1} parent=27 // pred_check
          %p256 = pneg %p80
        $region34: #{tpu_custom_call.1} parent=27 // pred_check_branch
          %258 = sbr.rel (%p256) target = $region36
        $region35: #{tpu_custom_call.1} parent=27 // pred_region
          %p259 = scmp.lt.s32.totalorder %s25, 1
          %s260 = scalar_select %p259, %s25, 1
          %p261 = scmp.lt.s32.totalorder %s26, 0
          %s262 = scalar_select %p261, %s26, 0
          %s263 = smul.addr %s262, 4
          %s264 = smul.addr %s260, 4
          %s265 = sadd.s32 %s263, %s264
          %s266 = scalar_lea.vmem %s1, %s265
        $region36: #{tpu_custom_call.1} parent=27 // pred_fallthru
          _
        // Predicated region
        $region37: #{tpu_custom_call.1} parent=27 // pred_check
          %p267 = pneg %p108
        $region38: #{tpu_custom_call.1} parent=27 // pred_check_branch
          %269 = sbr.rel (%p267) target = $region40
        $region39: #{tpu_custom_call.1} parent=27 // pred_region
          %p270 = scmp.lt.s32.totalorder %s25, 1
          %s271 = scalar_select %p270, %s25, 1
          %p272 = scmp.lt.s32.totalorder %s26, 0
          %s273 = scalar_select %p272, %s26, 0
          %s274 = smul.addr %s273, 4
          %s275 = smul.addr %s271, 4
          %s276 = sadd.s32 %s274, %s275
          %s277 = scalar_lea.vmem %s2, %s276
        $region40: #{tpu_custom_call.1} parent=27 // pred_fallthru
          _
      $region28: #{tpu_custom_call.1} parent=5 // pred_fallthru
        _
      %p278 = scmp.le.s32.totalorder 1, %s18
      %p279 = scmp.lt.s32.totalorder %s18, 3
      %p280 = pnand %p278, %p279
      %p281 = pneg %p280
      // Predicated region
      $region41: #{tpu_custom_call.1} parent=5 // pred_check
        _
      $region42: #{tpu_custom_call.1} parent=5 // pred_check_branch
        %283 = sbr.rel (%p280) target = $region44
      $region43: #{tpu_custom_call.1} parent=5 // pred_region
        %s284 = ssub.s32 %s18, 1
        %s285 = sand.u32 %s45, 1
        %s286 = scalar_lea.sflag [#allocation3], %s285
        %s287 = sand.u32 %s45, 1
        %s288 = smul.addr %s287, 64
        %s289 = scalar_lea.vmem [#allocation2], %s288
        // Predicated region
        $region45: #{tpu_custom_call.1} parent=43 // pred_check
          %p290 = pneg %p58
        $region46: #{tpu_custom_call.1} parent=43 // pred_check_branch
          %292 = sbr.rel (%p290) target = $region48
        $region47: #{tpu_custom_call.1} parent=43 // pred_region
          %293 = dma.done %s286, 1024
        $region48: #{tpu_custom_call.1} parent=43 // pred_fallthru
          _
        %s294 = sand.u32 %s45, 1
        %s295 = scalar_lea.sflag [#allocation3], %s294
        %s296 = sand.u32 %s45, 1
        %s297 = smul.addr %s296, 64
        %s298 = scalar_lea.vmem [#allocation2], %s297
        %p299 = pneg %p58
        %p300 = pneg %p55
        %p301 = scmp.lt.s32.totalorder %s27, 1
        %s302 = scalar_select %p301, %s27, 1
        %p303 = scmp.lt.s32.totalorder %s28, 0
        %s304 = scalar_select %p303, %s28, 0
        %s305 = smul.addr %s304, 4
        %s306 = smul.addr %s302, 4
        %s307 = sadd.s32 %s305, %s306
        %s308 = scalar_lea.vmem %s1, %s307
        %p309 = pneg %p86
        %p310 = pneg %p83
        %p311 = scmp.lt.s32.totalorder %s27, 1
        %s312 = scalar_select %p311, %s27, 1
        %p313 = scmp.lt.s32.totalorder %s28, 0
        %s314 = scalar_select %p313, %s28, 0
        %s315 = smul.addr %s314, 4
        %s316 = smul.addr %s312, 4
        %s317 = sadd.s32 %s315, %s316
        %s318 = scalar_lea.vmem %s2, %s317
        %p319 = pneg %p114
        %p320 = pneg %p111
        %p321 = pneg %p135
        %p322 = pneg %p132
        %p323 = pneg %p156
        %p324 = pneg %p153
        %p325 = pneg %p177
        %p326 = pneg %p174
        %p327 = pneg %p205
        %p328 = pneg %p202
        %s329 = sand.u32 %s192, 1
        %s330 = scalar_lea.sflag [#allocation4], %s329
        %s331 = sand.u32 %s192, 1
        %s332 = smul.addr %s331, 16
        %s333 = scalar_lea.vmem [#allocation5], %s332
        %s334 = smul.u32 2, %s28
        %p335 = scmp.lt.s32.totalorder %s27, 1
        %s336 = scalar_select %p335, %s27, 1
        %p337 = scmp.lt.s32.totalorder %s28, 0
        %s338 = scalar_select %p337, %s28, 0
        %s339 = smul.addr %s338, 4
        %s340 = smul.addr %s336, 4
        %s341 = sadd.s32 %s339, %s340
        %s342 = scalar_lea.vmem %s1, %s341
        %p343 = scmp.lt.s32.totalorder %s27, 1
        %s344 = scalar_select %p343, %s27, 1
        %p345 = scmp.lt.s32.totalorder %s28, 0
        %s346 = scalar_select %p345, %s28, 0
        %s347 = smul.addr %s346, 4
        %s348 = smul.addr %s344, 4
        %s349 = sadd.s32 %s347, %s348
        %s350 = scalar_lea.vmem %s2, %s349
        %s351 = smul.u32 2, %s28
        %v353 = vld [vmem:[%s289] sm:$0xff]
        %v354 = vld [vmem:[%s289 + $0x8] sm:$0xff]
        %v355 = vld [vmem:[%s289 + $0x10] sm:$0xff]
        %v356 = vld [vmem:[%s289 + $0x18] sm:$0xff]
        %v357 = vld [vmem:[%s289 + $0x20] sm:$0xff]
        %v358 = vld [vmem:[%s289 + $0x28] sm:$0xff]
        %v359 = vld [vmem:[%s289 + $0x30] sm:$0xff]
        %v360 = vld [vmem:[%s289 + $0x38] sm:$0xff]
        %v361 = vld [vmem:[%s342] sm:$0x1]
        %v362 = vld [vmem:[%s342 + $0x1] sm:$0x1]
        %v363 = vld [vmem:[%s342 + $0x2] sm:$0x1]
        %v364 = vld [vmem:[%s342 + $0x3] sm:$0x1]
        %v365 = vld [vmem:[%s350] sm:$0x1]
        %v366 = vld [vmem:[%s350 + $0x1] sm:$0x1]
        %v367 = vld [vmem:[%s350 + $0x2] sm:$0x1]
        %v368 = vld [vmem:[%s350 + $0x3] sm:$0x1]
        %vm377 = vcmask 1040384
        %v378 = vrot.slane %v353, 7
        %v379 = vrot.slane %v354, 7
        %v380 = vsel %vm377, %v378, %v379
        %v381 = vrot.slane %v355, 7
        %v382 = vrot.slane %v356, 7
        %v383 = vsel %vm377, %v381, %v382
        %v384 = vrot.slane %v357, 7
        %v385 = vrot.slane %v358, 7
        %v386 = vsel %vm377, %v384, %v385
        %v387 = vrot.slane %v359, 7
        %v388 = vrot.slane %v360, 7
        %v389 = vsel %vm377, %v387, %v388
        %v402 = vlaneseq
        %v403 = vshrl.u32 %v402, 7
        %v404 = vsub.s32 0, %v403
        %v405 = vrot.slane %v365, %v404
        %v406 = vlaneseq
        %v407 = vshrl.u32 %v406, 7
        %v408 = vsub.s32 0, %v407
        %v409 = vrot.slane %v366, %v408
        %v410 = vlaneseq
        %v411 = vshrl.u32 %v410, 7
        %v412 = vsub.s32 0, %v411
        %v413 = vrot.slane %v367, %v412
        %v414 = vlaneseq
        %v415 = vshrl.u32 %v414, 7
        %v416 = vsub.s32 0, %v415
        %v417 = vrot.slane %v368, %v416
        %v422 = vsel %vm377, %v361, %v378
        %v423 = vsel %vm377, %v362, %v381
        %v424 = vsel %vm377, %v363, %v384
        %v425 = vsel %vm377, %v364, %v387
        %v426 = vsel %vm377, %v379, %v405
        %v427 = vsel %vm377, %v382, %v409
        %v428 = vsel %vm377, %v385, %v413
        %v429 = vsel %vm377, %v388, %v417
        %438 = vrot.lane.b32.xlu0 %v422, 1
        %v439 = vpop.permute.xlu0 %438
        %440 = vrot.lane.b32.xlu0 %v380, 1
        %v441 = vpop.permute.xlu0 %440
        %442 = vrot.lane.b32.xlu0 %v426, 1
        %v443 = vpop.permute.xlu0 %442
        %444 = vrot.lane.b32.xlu0 %v423, 1
        %v445 = vpop.permute.xlu0 %444
        %446 = vrot.lane.b32.xlu0 %v383, 1
        %v447 = vpop.permute.xlu0 %446
        %448 = vrot.lane.b32.xlu0 %v427, 1
        %v449 = vpop.permute.xlu0 %448
        %450 = vrot.lane.b32.xlu0 %v424, 1
        %v451 = vpop.permute.xlu0 %450
        %452 = vrot.lane.b32.xlu0 %v386, 1
        %v453 = vpop.permute.xlu0 %452
        %454 = vrot.lane.b32.xlu0 %v428, 1
        %v455 = vpop.permute.xlu0 %454
        %456 = vrot.lane.b32.xlu0 %v425, 1
        %v457 = vpop.permute.xlu0 %456
        %458 = vrot.lane.b32.xlu0 %v389, 1
        %v459 = vpop.permute.xlu0 %458
        %460 = vrot.lane.b32.xlu0 %v429, 1
        %v461 = vpop.permute.xlu0 %460
        %vm474 = vcmask 7168
        %v475 = vsel %vm474, 0.0, %v439
        %v476 = vsel %vm474, 0.0, %v441
        %v477 = vsel %vm474, 0.0, %v443
        %v478 = vsel %vm474, 0.0, %v445
        %v479 = vsel %vm474, 0.0, %v447
        %v480 = vsel %vm474, 0.0, %v449
        %v481 = vsel %vm474, 0.0, %v451
        %v482 = vsel %vm474, 0.0, %v453
        %v483 = vsel %vm474, 0.0, %v455
        %v484 = vsel %vm474, 0.0, %v457
        %v485 = vsel %vm474, 0.0, %v459
        %v486 = vsel %vm474, 0.0, %v461
        %vm487 = vcmask 138240
        %v488 = vsel %vm487, %v475, 0.0
        %v489 = vsel %vm487, %v476, 0.0
        %v490 = vsel %vm487, %v477, 0.0
        %v491 = vsel %vm487, %v478, 0.0
        %v492 = vsel %vm487, %v479, 0.0
        %v493 = vsel %vm487, %v480, 0.0
        %v494 = vsel %vm487, %v481, 0.0
        %v495 = vsel %vm487, %v482, 0.0
        %v496 = vsel %vm487, %v483, 0.0
        %v497 = vsel %vm487, %v484, 0.0
        %v498 = vsel %vm487, %v485, 0.0
        %v499 = vsel %vm487, %v486, 0.0
        %v500 = vld [vmem:[%s3] sm:$0x1]
        %v501 = vld [vmem:[%s3 + $0x1] sm:$0x1]
        %v502 = vld [vmem:[%s3 + $0x2] sm:$0x1]
        %v503 = vld [vmem:[%s3 + $0x3] sm:$0x1]
        %v508 = vlaneseq
        %v509 = vshrl.u32 %v508, 7
        %v510 = vsub.s32 0, %v509
        %v511 = vrot.slane %v500, %v510
        %v512 = vlaneseq
        %v513 = vshrl.u32 %v512, 7
        %v514 = vsub.s32 0, %v513
        %v515 = vrot.slane %v501, %v514
        %v516 = vlaneseq
        %v517 = vshrl.u32 %v516, 7
        %v518 = vsub.s32 0, %v517
        %v519 = vrot.slane %v502, %v518
        %v520 = vlaneseq
        %v521 = vshrl.u32 %v520, 7
        %v522 = vsub.s32 0, %v521
        %v523 = vrot.slane %v503, %v522
        %524 = vset.pattern.permute.xlu0 0
        %525 = vperm.xlu0 %524, %v511
        %v526 = vpop.permute.xlu0 %525
        %528 = vset.pattern.permute.xlu0 0
        %529 = vperm.xlu0 %528, %v515
        %v530 = vpop.permute.xlu0 %529
        %532 = vset.pattern.permute.xlu0 0
        %533 = vperm.xlu0 %532, %v519
        %v534 = vpop.permute.xlu0 %533
        %536 = vset.pattern.permute.xlu0 0
        %537 = vperm.xlu0 %536, %v523
        %v538 = vpop.permute.xlu0 %537
        %v540 = vmul.f32 %v488, %v526
        %v541 = vmul.f32 %v489, %v526
        %v542 = vmul.f32 %v491, %v530
        %v543 = vmul.f32 %v492, %v530
        %v544 = vmul.f32 %v494, %v534
        %v545 = vmul.f32 %v495, %v534
        %v546 = vmul.f32 %v497, %v538
        %v547 = vmul.f32 %v498, %v538
        %v548 = vadd.f32 %v540, 0.0
        %v549 = vadd.f32 %v541, 0.0
        %v550 = vadd.f32 %v542, 0.0
        %v551 = vadd.f32 %v543, 0.0
        %v552 = vadd.f32 %v544, 0.0
        %v553 = vadd.f32 %v545, 0.0
        %v554 = vadd.f32 %v546, 0.0
        %v555 = vadd.f32 %v547, 0.0
        %s556 = scalar_lea.vmem %s3, 4
        %v557 = vld [vmem:[%s556] sm:$0x1]
        %v558 = vld [vmem:[%s556 + $0x1] sm:$0x1]
        %v559 = vld [vmem:[%s556 + $0x2] sm:$0x1]
        %v560 = vld [vmem:[%s556 + $0x3] sm:$0x1]
        %v565 = vlaneseq
        %v566 = vshrl.u32 %v565, 7
        %v567 = vsub.s32 0, %v566
        %v568 = vrot.slane %v557, %v567
        %v569 = vlaneseq
        %v570 = vshrl.u32 %v569, 7
        %v571 = vsub.s32 0, %v570
        %v572 = vrot.slane %v558, %v571
        %v573 = vlaneseq
        %v574 = vshrl.u32 %v573, 7
        %v575 = vsub.s32 0, %v574
        %v576 = vrot.slane %v559, %v575
        %v577 = vlaneseq
        %v578 = vshrl.u32 %v577, 7
        %v579 = vsub.s32 0, %v578
        %v580 = vrot.slane %v560, %v579
        %581 = vset.pattern.permute.xlu0 0
        %582 = vperm.xlu0 %581, %v568
        %v583 = vpop.permute.xlu0 %582
        %585 = vset.pattern.permute.xlu0 0
        %586 = vperm.xlu0 %585, %v572
        %v587 = vpop.permute.xlu0 %586
        %589 = vset.pattern.permute.xlu0 0
        %590 = vperm.xlu0 %589, %v576
        %v591 = vpop.permute.xlu0 %590
        %593 = vset.pattern.permute.xlu0 0
        %594 = vperm.xlu0 %593, %v580
        %v595 = vpop.permute.xlu0 %594
        %v597 = vmul.f32 %v488, %v583
        %v598 = vmul.f32 %v489, %v583
        %v599 = vmul.f32 %v491, %v587
        %v600 = vmul.f32 %v492, %v587
        %v601 = vmul.f32 %v494, %v591
        %v602 = vmul.f32 %v495, %v591
        %v603 = vmul.f32 %v497, %v595
        %v604 = vmul.f32 %v498, %v595
        %613 = vrot.lane.b32.xlu0 %v597, 127
        %v614 = vpop.permute.xlu0 %613
        %615 = vrot.lane.b32.xlu0 %v598, 127
        %v616 = vpop.permute.xlu0 %615
        %617 = vrot.lane.b32.xlu0 %v599, 127
        %v618 = vpop.permute.xlu0 %617
        %619 = vrot.lane.b32.xlu0 %v600, 127
        %v620 = vpop.permute.xlu0 %619
        %621 = vrot.lane.b32.xlu0 %v601, 127
        %v622 = vpop.permute.xlu0 %621
        %623 = vrot.lane.b32.xlu0 %v602, 127
        %v624 = vpop.permute.xlu0 %623
        %625 = vrot.lane.b32.xlu0 %v603, 127
        %v626 = vpop.permute.xlu0 %625
        %627 = vrot.lane.b32.xlu0 %v604, 127
        %v628 = vpop.permute.xlu0 %627
        %v637 = vadd.f32 %v548, %v614
        %v638 = vadd.f32 %v549, %v616
        %v639 = vadd.f32 %v550, %v618
        %v640 = vadd.f32 %v551, %v620
        %v641 = vadd.f32 %v552, %v622
        %v642 = vadd.f32 %v553, %v624
        %v643 = vadd.f32 %v554, %v626
        %v644 = vadd.f32 %v555, %v628
        %s645 = scalar_lea.vmem %s3, 8
        %v646 = vld [vmem:[%s645] sm:$0x1]
        %v647 = vld [vmem:[%s645 + $0x1] sm:$0x1]
        %v648 = vld [vmem:[%s645 + $0x2] sm:$0x1]
        %v649 = vld [vmem:[%s645 + $0x3] sm:$0x1]
        %v654 = vlaneseq
        %v655 = vshrl.u32 %v654, 7
        %v656 = vsub.s32 0, %v655
        %v657 = vrot.slane %v646, %v656
        %v658 = vlaneseq
        %v659 = vshrl.u32 %v658, 7
        %v660 = vsub.s32 0, %v659
        %v661 = vrot.slane %v647, %v660
        %v662 = vlaneseq
        %v663 = vshrl.u32 %v662, 7
        %v664 = vsub.s32 0, %v663
        %v665 = vrot.slane %v648, %v664
        %v666 = vlaneseq
        %v667 = vshrl.u32 %v666, 7
        %v668 = vsub.s32 0, %v667
        %v669 = vrot.slane %v649, %v668
        %670 = vset.pattern.permute.xlu0 0
        %671 = vperm.xlu0 %670, %v657
        %v672 = vpop.permute.xlu0 %671
        %674 = vset.pattern.permute.xlu0 0
        %675 = vperm.xlu0 %674, %v661
        %v676 = vpop.permute.xlu0 %675
        %678 = vset.pattern.permute.xlu0 0
        %679 = vperm.xlu0 %678, %v665
        %v680 = vpop.permute.xlu0 %679
        %682 = vset.pattern.permute.xlu0 0
        %683 = vperm.xlu0 %682, %v669
        %v684 = vpop.permute.xlu0 %683
        %v686 = vmul.f32 %v488, %v672
        %v687 = vmul.f32 %v489, %v672
        %v688 = vmul.f32 %v491, %v676
        %v689 = vmul.f32 %v492, %v676
        %v690 = vmul.f32 %v494, %v680
        %v691 = vmul.f32 %v495, %v680
        %v692 = vmul.f32 %v497, %v684
        %v693 = vmul.f32 %v498, %v684
        %702 = vrot.lane.b32.xlu0 %v686, 126
        %v703 = vpop.permute.xlu0 %702
        %704 = vrot.lane.b32.xlu0 %v687, 126
        %v705 = vpop.permute.xlu0 %704
        %706 = vrot.lane.b32.xlu0 %v688, 126
        %v707 = vpop.permute.xlu0 %706
        %708 = vrot.lane.b32.xlu0 %v689, 126
        %v709 = vpop.permute.xlu0 %708
        %710 = vrot.lane.b32.xlu0 %v690, 126
        %v711 = vpop.permute.xlu0 %710
        %712 = vrot.lane.b32.xlu0 %v691, 126
        %v713 = vpop.permute.xlu0 %712
        %714 = vrot.lane.b32.xlu0 %v692, 126
        %v715 = vpop.permute.xlu0 %714
        %716 = vrot.lane.b32.xlu0 %v693, 126
        %v717 = vpop.permute.xlu0 %716
        %v726 = vadd.f32 %v637, %v703
        %v727 = vadd.f32 %v638, %v705
        %v728 = vadd.f32 %v639, %v707
        %v729 = vadd.f32 %v640, %v709
        %v730 = vadd.f32 %v641, %v711
        %v731 = vadd.f32 %v642, %v713
        %v732 = vadd.f32 %v643, %v715
        %v733 = vadd.f32 %v644, %v717
        %s734 = scalar_lea.vmem %s3, 12
        %v735 = vld [vmem:[%s734] sm:$0x1]
        %v736 = vld [vmem:[%s734 + $0x1] sm:$0x1]
        %v737 = vld [vmem:[%s734 + $0x2] sm:$0x1]
        %v738 = vld [vmem:[%s734 + $0x3] sm:$0x1]
        %v743 = vlaneseq
        %v744 = vshrl.u32 %v743, 7
        %v745 = vsub.s32 0, %v744
        %v746 = vrot.slane %v735, %v745
        %v747 = vlaneseq
        %v748 = vshrl.u32 %v747, 7
        %v749 = vsub.s32 0, %v748
        %v750 = vrot.slane %v736, %v749
        %v751 = vlaneseq
        %v752 = vshrl.u32 %v751, 7
        %v753 = vsub.s32 0, %v752
        %v754 = vrot.slane %v737, %v753
        %v755 = vlaneseq
        %v756 = vshrl.u32 %v755, 7
        %v757 = vsub.s32 0, %v756
        %v758 = vrot.slane %v738, %v757
        %759 = vset.pattern.permute.xlu0 0
        %760 = vperm.xlu0 %759, %v746
        %v761 = vpop.permute.xlu0 %760
        %763 = vset.pattern.permute.xlu0 0
        %764 = vperm.xlu0 %763, %v750
        %v765 = vpop.permute.xlu0 %764
        %767 = vset.pattern.permute.xlu0 0
        %768 = vperm.xlu0 %767, %v754
        %v769 = vpop.permute.xlu0 %768
        %771 = vset.pattern.permute.xlu0 0
        %772 = vperm.xlu0 %771, %v758
        %v773 = vpop.permute.xlu0 %772
        %v775 = vmul.f32 %v488, %v761
        %v776 = vmul.f32 %v489, %v761
        %v777 = vmul.f32 %v490, %v761
        %v778 = vmul.f32 %v491, %v765
        %v779 = vmul.f32 %v492, %v765
        %v780 = vmul.f32 %v493, %v765
        %v781 = vmul.f32 %v494, %v769
        %v782 = vmul.f32 %v495, %v769
        %v783 = vmul.f32 %v496, %v769
        %v784 = vmul.f32 %v497, %v773
        %v785 = vmul.f32 %v498, %v773
        %v786 = vmul.f32 %v499, %v773
        %vm799 = vcmask 1046528
        %v800 = vrot.slane %v775, 1
        %v801 = vrot.slane %v776, 1
        %v802 = vsel %vm799, %v800, %v801
        %v803 = vrot.slane %v777, 1
        %v804 = vsel %vm799, %v801, %v803
        %v805 = vrot.slane %v778, 1
        %v806 = vrot.slane %v779, 1
        %v807 = vsel %vm799, %v805, %v806
        %v808 = vrot.slane %v780, 1
        %v809 = vsel %vm799, %v806, %v808
        %v810 = vrot.slane %v781, 1
        %v811 = vrot.slane %v782, 1
        %v812 = vsel %vm799, %v810, %v811
        %v813 = vrot.slane %v783, 1
        %v814 = vsel %vm799, %v811, %v813
        %v815 = vrot.slane %v784, 1
        %v816 = vrot.slane %v785, 1
        %v817 = vsel %vm799, %v815, %v816
        %v818 = vrot.slane %v786, 1
        %v819 = vsel %vm799, %v816, %v818
        %v828 = vadd.f32 %v726, %v802
        %v829 = vadd.f32 %v727, %v804
        %v830 = vadd.f32 %v728, %v807
        %v831 = vadd.f32 %v729, %v809
        %v832 = vadd.f32 %v730, %v812
        %v833 = vadd.f32 %v731, %v814
        %v834 = vadd.f32 %v732, %v817
        %v835 = vadd.f32 %v733, %v819
        %s836 = scalar_lea.vmem %s3, 16
        %v837 = vld [vmem:[%s836] sm:$0x1]
        %v838 = vld [vmem:[%s836 + $0x1] sm:$0x1]
        %v839 = vld [vmem:[%s836 + $0x2] sm:$0x1]
        %v840 = vld [vmem:[%s836 + $0x3] sm:$0x1]
        %v845 = vlaneseq
        %v846 = vshrl.u32 %v845, 7
        %v847 = vsub.s32 0, %v846
        %v848 = vrot.slane %v837, %v847
        %v849 = vlaneseq
        %v850 = vshrl.u32 %v849, 7
        %v851 = vsub.s32 0, %v850
        %v852 = vrot.slane %v838, %v851
        %v853 = vlaneseq
        %v854 = vshrl.u32 %v853, 7
        %v855 = vsub.s32 0, %v854
        %v856 = vrot.slane %v839, %v855
        %v857 = vlaneseq
        %v858 = vshrl.u32 %v857, 7
        %v859 = vsub.s32 0, %v858
        %v860 = vrot.slane %v840, %v859
        %861 = vset.pattern.permute.xlu0 0
        %862 = vperm.xlu0 %861, %v848
        %v863 = vpop.permute.xlu0 %862
        %865 = vset.pattern.permute.xlu0 0
        %866 = vperm.xlu0 %865, %v852
        %v867 = vpop.permute.xlu0 %866
        %869 = vset.pattern.permute.xlu0 0
        %870 = vperm.xlu0 %869, %v856
        %v871 = vpop.permute.xlu0 %870
        %873 = vset.pattern.permute.xlu0 0
        %874 = vperm.xlu0 %873, %v860
        %v875 = vpop.permute.xlu0 %874
        %v877 = vmul.f32 %v488, %v863
        %v878 = vmul.f32 %v489, %v863
        %v879 = vmul.f32 %v490, %v863
        %v880 = vmul.f32 %v491, %v867
        %v881 = vmul.f32 %v492, %v867
        %v882 = vmul.f32 %v493, %v867
        %v883 = vmul.f32 %v494, %v871
        %v884 = vmul.f32 %v495, %v871
        %v885 = vmul.f32 %v496, %v871
        %v886 = vmul.f32 %v497, %v875
        %v887 = vmul.f32 %v498, %v875
        %v888 = vmul.f32 %v499, %v875
        %v901 = vrot.slane %v877, 1
        %v902 = vrot.slane %v878, 1
        %v903 = vsel %vm799, %v901, %v902
        %v904 = vrot.slane %v879, 1
        %v905 = vsel %vm799, %v902, %v904
        %v906 = vrot.slane %v880, 1
        %v907 = vrot.slane %v881, 1
        %v908 = vsel %vm799, %v906, %v907
        %v909 = vrot.slane %v882, 1
        %v910 = vsel %vm799, %v907, %v909
        %v911 = vrot.slane %v883, 1
        %v912 = vrot.slane %v884, 1
        %v913 = vsel %vm799, %v911, %v912
        %v914 = vrot.slane %v885, 1
        %v915 = vsel %vm799, %v912, %v914
        %v916 = vrot.slane %v886, 1
        %v917 = vrot.slane %v887, 1
        %v918 = vsel %vm799, %v916, %v917
        %v919 = vrot.slane %v888, 1
        %v920 = vsel %vm799, %v917, %v919
        %921 = vrot.lane.b32.xlu0 %v903, 127
        %v922 = vpop.permute.xlu0 %921
        %923 = vrot.lane.b32.xlu0 %v905, 127
        %v924 = vpop.permute.xlu0 %923
        %925 = vrot.lane.b32.xlu0 %v908, 127
        %v926 = vpop.permute.xlu0 %925
        %927 = vrot.lane.b32.xlu0 %v910, 127
        %v928 = vpop.permute.xlu0 %927
        %929 = vrot.lane.b32.xlu0 %v913, 127
        %v930 = vpop.permute.xlu0 %929
        %931 = vrot.lane.b32.xlu0 %v915, 127
        %v932 = vpop.permute.xlu0 %931
        %933 = vrot.lane.b32.xlu0 %v918, 127
        %v934 = vpop.permute.xlu0 %933
        %935 = vrot.lane.b32.xlu0 %v920, 127
        %v936 = vpop.permute.xlu0 %935
        %v945 = vadd.f32 %v828, %v922
        %v946 = vadd.f32 %v829, %v924
        %v947 = vadd.f32 %v830, %v926
        %v948 = vadd.f32 %v831, %v928
        %v949 = vadd.f32 %v832, %v930
        %v950 = vadd.f32 %v833, %v932
        %v951 = vadd.f32 %v834, %v934
        %v952 = vadd.f32 %v835, %v936
        %s953 = scalar_lea.vmem %s3, 20
        %v954 = vld [vmem:[%s953] sm:$0x1]
        %v955 = vld [vmem:[%s953 + $0x1] sm:$0x1]
        %v956 = vld [vmem:[%s953 + $0x2] sm:$0x1]
        %v957 = vld [vmem:[%s953 + $0x3] sm:$0x1]
        %v962 = vlaneseq
        %v963 = vshrl.u32 %v962, 7
        %v964 = vsub.s32 0, %v963
        %v965 = vrot.slane %v954, %v964
        %v966 = vlaneseq
        %v967 = vshrl.u32 %v966, 7
        %v968 = vsub.s32 0, %v967
        %v969 = vrot.slane %v955, %v968
        %v970 = vlaneseq
        %v971 = vshrl.u32 %v970, 7
        %v972 = vsub.s32 0, %v971
        %v973 = vrot.slane %v956, %v972
        %v974 = vlaneseq
        %v975 = vshrl.u32 %v974, 7
        %v976 = vsub.s32 0, %v975
        %v977 = vrot.slane %v957, %v976
        %978 = vset.pattern.permute.xlu0 0
        %979 = vperm.xlu0 %978, %v965
        %v980 = vpop.permute.xlu0 %979
        %982 = vset.pattern.permute.xlu0 0
        %983 = vperm.xlu0 %982, %v969
        %v984 = vpop.permute.xlu0 %983
        %986 = vset.pattern.permute.xlu0 0
        %987 = vperm.xlu0 %986, %v973
        %v988 = vpop.permute.xlu0 %987
        %990 = vset.pattern.permute.xlu0 0
        %991 = vperm.xlu0 %990, %v977
        %v992 = vpop.permute.xlu0 %991
        %v994 = vmul.f32 %v488, %v980
        %v995 = vmul.f32 %v489, %v980
        %v996 = vmul.f32 %v490, %v980
        %v997 = vmul.f32 %v491, %v984
        %v998 = vmul.f32 %v492, %v984
        %v999 = vmul.f32 %v493, %v984
        %v1000 = vmul.f32 %v494, %v988
        %v1001 = vmul.f32 %v495, %v988
        %v1002 = vmul.f32 %v496, %v988
        %v1003 = vmul.f32 %v497, %v992
        %v1004 = vmul.f32 %v498, %v992
        %v1005 = vmul.f32 %v499, %v992
        %v1018 = vrot.slane %v994, 1
        %v1019 = vrot.slane %v995, 1
        %v1020 = vsel %vm799, %v1018, %v1019
        %v1021 = vrot.slane %v996, 1
        %v1022 = vsel %vm799, %v1019, %v1021
        %v1023 = vrot.slane %v997, 1
        %v1024 = vrot.slane %v998, 1
        %v1025 = vsel %vm799, %v1023, %v1024
        %v1026 = vrot.slane %v999, 1
        %v1027 = vsel %vm799, %v1024, %v1026
        %v1028 = vrot.slane %v1000, 1
        %v1029 = vrot.slane %v1001, 1
        %v1030 = vsel %vm799, %v1028, %v1029
        %v1031 = vrot.slane %v1002, 1
        %v1032 = vsel %vm799, %v1029, %v1031
        %v1033 = vrot.slane %v1003, 1
        %v1034 = vrot.slane %v1004, 1
        %v1035 = vsel %vm799, %v1033, %v1034
        %v1036 = vrot.slane %v1005, 1
        %v1037 = vsel %vm799, %v1034, %v1036
        %1038 = vrot.lane.b32.xlu0 %v1020, 126
        %v1039 = vpop.permute.xlu0 %1038
        %1040 = vrot.lane.b32.xlu0 %v1022, 126
        %v1041 = vpop.permute.xlu0 %1040
        %1042 = vrot.lane.b32.xlu0 %v1025, 126
        %v1043 = vpop.permute.xlu0 %1042
        %1044 = vrot.lane.b32.xlu0 %v1027, 126
        %v1045 = vpop.permute.xlu0 %1044
        %1046 = vrot.lane.b32.xlu0 %v1030, 126
        %v1047 = vpop.permute.xlu0 %1046
        %1048 = vrot.lane.b32.xlu0 %v1032, 126
        %v1049 = vpop.permute.xlu0 %1048
        %1050 = vrot.lane.b32.xlu0 %v1035, 126
        %v1051 = vpop.permute.xlu0 %1050
        %1052 = vrot.lane.b32.xlu0 %v1037, 126
        %v1053 = vpop.permute.xlu0 %1052
        %v1062 = vadd.f32 %v945, %v1039
        %v1063 = vadd.f32 %v946, %v1041
        %v1064 = vadd.f32 %v947, %v1043
        %v1065 = vadd.f32 %v948, %v1045
        %v1066 = vadd.f32 %v949, %v1047
        %v1067 = vadd.f32 %v950, %v1049
        %v1068 = vadd.f32 %v951, %v1051
        %v1069 = vadd.f32 %v952, %v1053
        %s1070 = scalar_lea.vmem %s3, 24
        %v1071 = vld [vmem:[%s1070] sm:$0x1]
        %v1072 = vld [vmem:[%s1070 + $0x1] sm:$0x1]
        %v1073 = vld [vmem:[%s1070 + $0x2] sm:$0x1]
        %v1074 = vld [vmem:[%s1070 + $0x3] sm:$0x1]
        %v1079 = vlaneseq
        %v1080 = vshrl.u32 %v1079, 7
        %v1081 = vsub.s32 0, %v1080
        %v1082 = vrot.slane %v1071, %v1081
        %v1083 = vlaneseq
        %v1084 = vshrl.u32 %v1083, 7
        %v1085 = vsub.s32 0, %v1084
        %v1086 = vrot.slane %v1072, %v1085
        %v1087 = vlaneseq
        %v1088 = vshrl.u32 %v1087, 7
        %v1089 = vsub.s32 0, %v1088
        %v1090 = vrot.slane %v1073, %v1089
        %v1091 = vlaneseq
        %v1092 = vshrl.u32 %v1091, 7
        %v1093 = vsub.s32 0, %v1092
        %v1094 = vrot.slane %v1074, %v1093
        %1095 = vset.pattern.permute.xlu0 0
        %1096 = vperm.xlu0 %1095, %v1082
        %v1097 = vpop.permute.xlu0 %1096
        %1099 = vset.pattern.permute.xlu0 0
        %1100 = vperm.xlu0 %1099, %v1086
        %v1101 = vpop.permute.xlu0 %1100
        %1103 = vset.pattern.permute.xlu0 0
        %1104 = vperm.xlu0 %1103, %v1090
        %v1105 = vpop.permute.xlu0 %1104
        %1107 = vset.pattern.permute.xlu0 0
        %1108 = vperm.xlu0 %1107, %v1094
        %v1109 = vpop.permute.xlu0 %1108
        %v1111 = vmul.f32 %v488, %v1097
        %v1112 = vmul.f32 %v489, %v1097
        %v1113 = vmul.f32 %v490, %v1097
        %v1114 = vmul.f32 %v491, %v1101
        %v1115 = vmul.f32 %v492, %v1101
        %v1116 = vmul.f32 %v493, %v1101
        %v1117 = vmul.f32 %v494, %v1105
        %v1118 = vmul.f32 %v495, %v1105
        %v1119 = vmul.f32 %v496, %v1105
        %v1120 = vmul.f32 %v497, %v1109
        %v1121 = vmul.f32 %v498, %v1109
        %v1122 = vmul.f32 %v499, %v1109
        %vm1135 = vcmask 1045504
        %v1136 = vrot.slane %v1111, 2
        %v1137 = vrot.slane %v1112, 2
        %v1138 = vsel %vm1135, %v1136, %v1137
        %v1139 = vrot.slane %v1113, 2
        %v1140 = vsel %vm1135, %v1137, %v1139
        %v1141 = vrot.slane %v1114, 2
        %v1142 = vrot.slane %v1115, 2
        %v1143 = vsel %vm1135, %v1141, %v1142
        %v1144 = vrot.slane %v1116, 2
        %v1145 = vsel %vm1135, %v1142, %v1144
        %v1146 = vrot.slane %v1117, 2
        %v1147 = vrot.slane %v1118, 2
        %v1148 = vsel %vm1135, %v1146, %v1147
        %v1149 = vrot.slane %v1119, 2
        %v1150 = vsel %vm1135, %v1147, %v1149
        %v1151 = vrot.slane %v1120, 2
        %v1152 = vrot.slane %v1121, 2
        %v1153 = vsel %vm1135, %v1151, %v1152
        %v1154 = vrot.slane %v1122, 2
        %v1155 = vsel %vm1135, %v1152, %v1154
        %v1164 = vadd.f32 %v1062, %v1138
        %v1165 = vadd.f32 %v1063, %v1140
        %v1166 = vadd.f32 %v1064, %v1143
        %v1167 = vadd.f32 %v1065, %v1145
        %v1168 = vadd.f32 %v1066, %v1148
        %v1169 = vadd.f32 %v1067, %v1150
        %v1170 = vadd.f32 %v1068, %v1153
        %v1171 = vadd.f32 %v1069, %v1155
        %s1172 = scalar_lea.vmem %s3, 28
        %v1173 = vld [vmem:[%s1172] sm:$0x1]
        %v1174 = vld [vmem:[%s1172 + $0x1] sm:$0x1]
        %v1175 = vld [vmem:[%s1172 + $0x2] sm:$0x1]
        %v1176 = vld [vmem:[%s1172 + $0x3] sm:$0x1]
        %v1181 = vlaneseq
        %v1182 = vshrl.u32 %v1181, 7
        %v1183 = vsub.s32 0, %v1182
        %v1184 = vrot.slane %v1173, %v1183
        %v1185 = vlaneseq
        %v1186 = vshrl.u32 %v1185, 7
        %v1187 = vsub.s32 0, %v1186
        %v1188 = vrot.slane %v1174, %v1187
        %v1189 = vlaneseq
        %v1190 = vshrl.u32 %v1189, 7
        %v1191 = vsub.s32 0, %v1190
        %v1192 = vrot.slane %v1175, %v1191
        %v1193 = vlaneseq
        %v1194 = vshrl.u32 %v1193, 7
        %v1195 = vsub.s32 0, %v1194
        %v1196 = vrot.slane %v1176, %v1195
        %1197 = vset.pattern.permute.xlu0 0
        %1198 = vperm.xlu0 %1197, %v1184
        %v1199 = vpop.permute.xlu0 %1198
        %1201 = vset.pattern.permute.xlu0 0
        %1202 = vperm.xlu0 %1201, %v1188
        %v1203 = vpop.permute.xlu0 %1202
        %1205 = vset.pattern.permute.xlu0 0
        %1206 = vperm.xlu0 %1205, %v1192
        %v1207 = vpop.permute.xlu0 %1206
        %1209 = vset.pattern.permute.xlu0 0
        %1210 = vperm.xlu0 %1209, %v1196
        %v1211 = vpop.permute.xlu0 %1210
        %v1213 = vmul.f32 %v488, %v1199
        %v1214 = vmul.f32 %v489, %v1199
        %v1215 = vmul.f32 %v490, %v1199
        %v1216 = vmul.f32 %v491, %v1203
        %v1217 = vmul.f32 %v492, %v1203
        %v1218 = vmul.f32 %v493, %v1203
        %v1219 = vmul.f32 %v494, %v1207
        %v1220 = vmul.f32 %v495, %v1207
        %v1221 = vmul.f32 %v496, %v1207
        %v1222 = vmul.f32 %v497, %v1211
        %v1223 = vmul.f32 %v498, %v1211
        %v1224 = vmul.f32 %v499, %v1211
        %v1237 = vrot.slane %v1213, 2
        %v1238 = vrot.slane %v1214, 2
        %v1239 = vsel %vm1135, %v1237, %v1238
        %v1240 = vrot.slane %v1215, 2
        %v1241 = vsel %vm1135, %v1238, %v1240
        %v1242 = vrot.slane %v1216, 2
        %v1243 = vrot.slane %v1217, 2
        %v1244 = vsel %vm1135, %v1242, %v1243
        %v1245 = vrot.slane %v1218, 2
        %v1246 = vsel %vm1135, %v1243, %v1245
        %v1247 = vrot.slane %v1219, 2
        %v1248 = vrot.slane %v1220, 2
        %v1249 = vsel %vm1135, %v1247, %v1248
        %v1250 = vrot.slane %v1221, 2
        %v1251 = vsel %vm1135, %v1248, %v1250
        %v1252 = vrot.slane %v1222, 2
        %v1253 = vrot.slane %v1223, 2
        %v1254 = vsel %vm1135, %v1252, %v1253
        %v1255 = vrot.slane %v1224, 2
        %v1256 = vsel %vm1135, %v1253, %v1255
        %1257 = vrot.lane.b32.xlu0 %v1239, 127
        %v1258 = vpop.permute.xlu0 %1257
        %1259 = vrot.lane.b32.xlu0 %v1241, 127
        %v1260 = vpop.permute.xlu0 %1259
        %1261 = vrot.lane.b32.xlu0 %v1244, 127
        %v1262 = vpop.permute.xlu0 %1261
        %1263 = vrot.lane.b32.xlu0 %v1246, 127
        %v1264 = vpop.permute.xlu0 %1263
        %1265 = vrot.lane.b32.xlu0 %v1249, 127
        %v1266 = vpop.permute.xlu0 %1265
        %1267 = vrot.lane.b32.xlu0 %v1251, 127
        %v1268 = vpop.permute.xlu0 %1267
        %1269 = vrot.lane.b32.xlu0 %v1254, 127
        %v1270 = vpop.permute.xlu0 %1269
        %1271 = vrot.lane.b32.xlu0 %v1256, 127
        %v1272 = vpop.permute.xlu0 %1271
        %v1281 = vadd.f32 %v1164, %v1258
        %v1282 = vadd.f32 %v1165, %v1260
        %v1283 = vadd.f32 %v1166, %v1262
        %v1284 = vadd.f32 %v1167, %v1264
        %v1285 = vadd.f32 %v1168, %v1266
        %v1286 = vadd.f32 %v1169, %v1268
        %v1287 = vadd.f32 %v1170, %v1270
        %v1288 = vadd.f32 %v1171, %v1272
        %s1289 = scalar_lea.vmem %s3, 32
        %v1290 = vld [vmem:[%s1289] sm:$0x1]
        %v1291 = vld [vmem:[%s1289 + $0x1] sm:$0x1]
        %v1292 = vld [vmem:[%s1289 + $0x2] sm:$0x1]
        %v1293 = vld [vmem:[%s1289 + $0x3] sm:$0x1]
        %v1298 = vlaneseq
        %v1299 = vshrl.u32 %v1298, 7
        %v1300 = vsub.s32 0, %v1299
        %v1301 = vrot.slane %v1290, %v1300
        %v1302 = vlaneseq
        %v1303 = vshrl.u32 %v1302, 7
        %v1304 = vsub.s32 0, %v1303
        %v1305 = vrot.slane %v1291, %v1304
        %v1306 = vlaneseq
        %v1307 = vshrl.u32 %v1306, 7
        %v1308 = vsub.s32 0, %v1307
        %v1309 = vrot.slane %v1292, %v1308
        %v1310 = vlaneseq
        %v1311 = vshrl.u32 %v1310, 7
        %v1312 = vsub.s32 0, %v1311
        %v1313 = vrot.slane %v1293, %v1312
        %1314 = vset.pattern.permute.xlu0 0
        %1315 = vperm.xlu0 %1314, %v1301
        %v1316 = vpop.permute.xlu0 %1315
        %1318 = vset.pattern.permute.xlu0 0
        %1319 = vperm.xlu0 %1318, %v1305
        %v1320 = vpop.permute.xlu0 %1319
        %1322 = vset.pattern.permute.xlu0 0
        %1323 = vperm.xlu0 %1322, %v1309
        %v1324 = vpop.permute.xlu0 %1323
        %1326 = vset.pattern.permute.xlu0 0
        %1327 = vperm.xlu0 %1326, %v1313
        %v1328 = vpop.permute.xlu0 %1327
        %v1330 = vmul.f32 %v488, %v1316
        %v1331 = vmul.f32 %v489, %v1316
        %v1332 = vmul.f32 %v490, %v1316
        %v1333 = vmul.f32 %v491, %v1320
        %v1334 = vmul.f32 %v492, %v1320
        %v1335 = vmul.f32 %v493, %v1320
        %v1336 = vmul.f32 %v494, %v1324
        %v1337 = vmul.f32 %v495, %v1324
        %v1338 = vmul.f32 %v496, %v1324
        %v1339 = vmul.f32 %v497, %v1328
        %v1340 = vmul.f32 %v498, %v1328
        %v1341 = vmul.f32 %v499, %v1328
        %v1354 = vrot.slane %v1330, 2
        %v1355 = vrot.slane %v1331, 2
        %v1356 = vsel %vm1135, %v1354, %v1355
        %v1357 = vrot.slane %v1332, 2
        %v1358 = vsel %vm1135, %v1355, %v1357
        %v1359 = vrot.slane %v1333, 2
        %v1360 = vrot.slane %v1334, 2
        %v1361 = vsel %vm1135, %v1359, %v1360
        %v1362 = vrot.slane %v1335, 2
        %v1363 = vsel %vm1135, %v1360, %v1362
        %v1364 = vrot.slane %v1336, 2
        %v1365 = vrot.slane %v1337, 2
        %v1366 = vsel %vm1135, %v1364, %v1365
        %v1367 = vrot.slane %v1338, 2
        %v1368 = vsel %vm1135, %v1365, %v1367
        %v1369 = vrot.slane %v1339, 2
        %v1370 = vrot.slane %v1340, 2
        %v1371 = vsel %vm1135, %v1369, %v1370
        %v1372 = vrot.slane %v1341, 2
        %v1373 = vsel %vm1135, %v1370, %v1372
        %1374 = vrot.lane.b32.xlu0 %v1356, 126
        %v1375 = vpop.permute.xlu0 %1374
        %1376 = vrot.lane.b32.xlu0 %v1358, 126
        %v1377 = vpop.permute.xlu0 %1376
        %1378 = vrot.lane.b32.xlu0 %v1361, 126
        %v1379 = vpop.permute.xlu0 %1378
        %1380 = vrot.lane.b32.xlu0 %v1363, 126
        %v1381 = vpop.permute.xlu0 %1380
        %1382 = vrot.lane.b32.xlu0 %v1366, 126
        %v1383 = vpop.permute.xlu0 %1382
        %1384 = vrot.lane.b32.xlu0 %v1368, 126
        %v1385 = vpop.permute.xlu0 %1384
        %1386 = vrot.lane.b32.xlu0 %v1371, 126
        %v1387 = vpop.permute.xlu0 %1386
        %1388 = vrot.lane.b32.xlu0 %v1373, 126
        %v1389 = vpop.permute.xlu0 %1388
        %v1398 = vadd.f32 %v1281, %v1375
        %v1399 = vadd.f32 %v1282, %v1377
        %v1400 = vadd.f32 %v1283, %v1379
        %v1401 = vadd.f32 %v1284, %v1381
        %v1402 = vadd.f32 %v1285, %v1383
        %v1403 = vadd.f32 %v1286, %v1385
        %v1404 = vadd.f32 %v1287, %v1387
        %v1405 = vadd.f32 %v1288, %v1389
        %v1406 = vcombine.low %v1398, %v1402
        %v1407 = vcombine.high %v1398, %v1402
        %v1409 = vunpack.c.l.s4 1983009808
        %v1410 = vunpack.c.0.s8 %v1409
        %v1411 = vlaneseq
        %v1412 = vshrl.u32 %v1411, 7
        %v1413 = vsub.s32 %v1410, %v1412
        %v1414 = vrot.slane %v1406, %v1413
        %v1416 = vunpack.c.l.s4 1983009808
        %v1417 = vunpack.c.0.s8 %v1416
        %v1418 = vlaneseq
        %v1419 = vshrl.u32 %v1418, 7
        %v1420 = vsub.s32 %v1417, %v1419
        %v1421 = vrot.slane %v1407, %v1420
        %v1422 = vcombine.low %v1400, %v1404
        %v1423 = vcombine.high %v1400, %v1404
        %v1425 = vunpack.c.l.s4 1983009808
        %v1426 = vunpack.c.0.s8 %v1425
        %v1427 = vlaneseq
        %v1428 = vshrl.u32 %v1427, 7
        %v1429 = vsub.s32 %v1426, %v1428
        %v1430 = vrot.slane %v1422, %v1429
        %v1432 = vunpack.c.l.s4 1983009808
        %v1433 = vunpack.c.0.s8 %v1432
        %v1434 = vlaneseq
        %v1435 = vshrl.u32 %v1434, 7
        %v1436 = vsub.s32 %v1433, %v1435
        %v1437 = vrot.slane %v1423, %v1436
        %v1438 = vcombine.low %v1414, %v1430
        %v1439 = vcombine.high %v1414, %v1430
        %v1441 = vunpack.c.l.s4 1934713408
        %v1442 = vunpack.c.0.s8 %v1441
        %v1443 = vlaneseq
        %v1444 = vshrl.u32 %v1443, 7
        %v1445 = vsub.s32 %v1442, %v1444
        %v1446 = vrot.slane %v1438, %v1445
        %v1448 = vunpack.c.l.s4 1934713408
        %v1449 = vunpack.c.0.s8 %v1448
        %v1450 = vlaneseq
        %v1451 = vshrl.u32 %v1450, 7
        %v1452 = vsub.s32 %v1449, %v1451
        %v1453 = vrot.slane %v1439, %v1452
        %v1454 = vcombine.low %v1421, %v1437
        %v1455 = vcombine.high %v1421, %v1437
        %v1457 = vunpack.c.l.s4 1934713408
        %v1458 = vunpack.c.0.s8 %v1457
        %v1459 = vlaneseq
        %v1460 = vshrl.u32 %v1459, 7
        %v1461 = vsub.s32 %v1458, %v1460
        %v1462 = vrot.slane %v1454, %v1461
        %v1464 = vunpack.c.l.s4 1934713408
        %v1465 = vunpack.c.0.s8 %v1464
        %v1466 = vlaneseq
        %v1467 = vshrl.u32 %v1466, 7
        %v1468 = vsub.s32 %v1465, %v1467
        %v1469 = vrot.slane %v1455, %v1468
        %v1470 = vcombine.high %v1446, 0.0
        %v1471 = vcombine.high %v1453, 0.0
        %v1472 = vcombine.high %v1462, 0.0
        %v1473 = vcombine.high %v1469, 0.0
        %v1474 = vcombine.low %v1399, %v1403
        %v1475 = vcombine.high %v1399, %v1403
        %v1477 = vunpack.c.l.s4 1983009808
        %v1478 = vunpack.c.0.s8 %v1477
        %v1479 = vlaneseq
        %v1480 = vshrl.u32 %v1479, 7
        %v1481 = vsub.s32 %v1478, %v1480
        %v1482 = vrot.slane %v1474, %v1481
        %v1484 = vunpack.c.l.s4 1983009808
        %v1485 = vunpack.c.0.s8 %v1484
        %v1486 = vlaneseq
        %v1487 = vshrl.u32 %v1486, 7
        %v1488 = vsub.s32 %v1485, %v1487
        %v1489 = vrot.slane %v1475, %v1488
        %v1490 = vcombine.low %v1401, %v1405
        %v1491 = vcombine.high %v1401, %v1405
        %v1493 = vunpack.c.l.s4 1983009808
        %v1494 = vunpack.c.0.s8 %v1493
        %v1495 = vlaneseq
        %v1496 = vshrl.u32 %v1495, 7
        %v1497 = vsub.s32 %v1494, %v1496
        %v1498 = vrot.slane %v1490, %v1497
        %v1500 = vunpack.c.l.s4 1983009808
        %v1501 = vunpack.c.0.s8 %v1500
        %v1502 = vlaneseq
        %v1503 = vshrl.u32 %v1502, 7
        %v1504 = vsub.s32 %v1501, %v1503
        %v1505 = vrot.slane %v1491, %v1504
        %v1506 = vcombine.low %v1482, %v1498
        %v1507 = vcombine.high %v1482, %v1498
        %v1509 = vunpack.c.l.s4 1934713408
        %v1510 = vunpack.c.0.s8 %v1509
        %v1511 = vlaneseq
        %v1512 = vshrl.u32 %v1511, 7
        %v1513 = vsub.s32 %v1510, %v1512
        %v1514 = vrot.slane %v1506, %v1513
        %v1516 = vunpack.c.l.s4 1934713408
        %v1517 = vunpack.c.0.s8 %v1516
        %v1518 = vlaneseq
        %v1519 = vshrl.u32 %v1518, 7
        %v1520 = vsub.s32 %v1517, %v1519
        %v1521 = vrot.slane %v1507, %v1520
        %v1522 = vcombine.low %v1489, %v1505
        %v1523 = vcombine.high %v1489, %v1505
        %v1525 = vunpack.c.l.s4 1934713408
        %v1526 = vunpack.c.0.s8 %v1525
        %v1527 = vlaneseq
        %v1528 = vshrl.u32 %v1527, 7
        %v1529 = vsub.s32 %v1526, %v1528
        %v1530 = vrot.slane %v1522, %v1529
        %v1532 = vunpack.c.l.s4 1934713408
        %v1533 = vunpack.c.0.s8 %v1532
        %v1534 = vlaneseq
        %v1535 = vshrl.u32 %v1534, 7
        %v1536 = vsub.s32 %v1533, %v1535
        %v1537 = vrot.slane %v1523, %v1536
        %v1538 = vcombine.high %v1514, 0.0
        %v1539 = vcombine.high %v1521, 0.0
        %v1540 = vcombine.high %v1530, 0.0
        %v1541 = vcombine.high %v1537, 0.0
        %1543 = vrot.lane.b32.xlu0 %v1470, 16
        %v1544 = vpop.permute.xlu0 %1543
        %1547 = vrot.lane.b32.xlu0 %v1453, 32
        %v1548 = vpop.permute.xlu0 %1547
        %1551 = vrot.lane.b32.xlu0 %v1471, 48
        %v1552 = vpop.permute.xlu0 %1551
        %1555 = vrot.lane.b32.xlu0 %v1462, 64
        %v1556 = vpop.permute.xlu0 %1555
        %1559 = vrot.lane.b32.xlu0 %v1472, 80
        %v1560 = vpop.permute.xlu0 %1559
        %1563 = vrot.lane.b32.xlu0 %v1469, 96
        %v1564 = vpop.permute.xlu0 %1563
        %1567 = vrot.lane.b32.xlu0 %v1473, 112
        %v1568 = vpop.permute.xlu0 %1567
        %1571 = vrot.lane.b32.xlu0 %v1538, 16
        %v1572 = vpop.permute.xlu0 %1571
        %1575 = vrot.lane.b32.xlu0 %v1521, 32
        %v1576 = vpop.permute.xlu0 %1575
        %1579 = vrot.lane.b32.xlu0 %v1539, 48
        %v1580 = vpop.permute.xlu0 %1579
        %1583 = vrot.lane.b32.xlu0 %v1530, 64
        %v1584 = vpop.permute.xlu0 %1583
        %1587 = vrot.lane.b32.xlu0 %v1540, 80
        %v1588 = vpop.permute.xlu0 %1587
        %1591 = vrot.lane.b32.xlu0 %v1537, 96
        %v1592 = vpop.permute.xlu0 %1591
        %1595 = vrot.lane.b32.xlu0 %v1541, 112
        %v1596 = vpop.permute.xlu0 %1595
        %vm1598 = vcmask 130048
        %v1599 = vsel %vm1598, %v1446, %v1544
        %vm1600 = vcmask 261120
        %v1601 = vsel %vm1600, %v1599, %v1548
        %vm1602 = vcmask 392192
        %v1603 = vsel %vm1602, %v1601, %v1552
        %vm1604 = vcmask 523264
        %v1605 = vsel %vm1604, %v1603, %v1556
        %vm1606 = vcmask 654336
        %v1607 = vsel %vm1606, %v1605, %v1560
        %vm1608 = vcmask 785408
        %v1609 = vsel %vm1608, %v1607, %v1564
        %vm1610 = vcmask 916480
        %v1611 = vsel %vm1610, %v1609, %v1568
        %v1612 = vsel %vm1598, %v1514, %v1572
        %v1613 = vsel %vm1600, %v1612, %v1576
        %v1614 = vsel %vm1602, %v1613, %v1580
        %v1615 = vsel %vm1604, %v1614, %v1584
        %v1616 = vsel %vm1606, %v1615, %v1588
        %v1617 = vsel %vm1608, %v1616, %v1592
        %v1618 = vsel %vm1610, %v1617, %v1596
        %v1619 = vld [vmem:[%s4] sm:$0xf]
        %v1620 = vpack.c.bf16 %v1611, %v1611
        %v1621 = vpack.c.bf16 %v1618, %v1618
        %v1622 = vld [vmem:[%s5] sm:$0xff]
        %1624 = vset.pattern.permute.xlu0 0
        %1625 = vperm.xlu0 %1624, %v1622
        %v1626 = vpop.permute.xlu0 %1625
        %vm1628 = vcmask 31744
        %v1630 = vsel %vm1628, %v1619, 0
        %vm1632 = vcmask 1041408
        %v1634 = vsel %vm1632, %v1620, 0
        %v1637 = vsel %vm1632, %v1621, 0
        %1639 = vmatprep.subr.bf16.mxu0 %v1637
        %1640 = vmatpush1.bf16.msra.mxu0 %v1634
        %1641 = vmatprep.subr.bf16.mxu0 0
        %1642 = vmatpush1.bf16.msra.mxu0 0
        %1643 = vmatprep.subr.bf16.mxu0 0
        %1644 = vmatpush1.bf16.msra.mxu0 0
        %1645 = vmatprep.subr.bf16.mxu0 0
        %1646 = vmatpush1.bf16.msra.mxu0 0
        %1647 = vmatprep.subr.bf16.mxu0 0
        %1648 = vmatpush1.bf16.msra.mxu0 0
        %1649 = vmatprep.subr.bf16.mxu0 0
        %1650 = vmatpush1.bf16.msra.mxu0 0
        %1651 = vmatprep.subr.bf16.mxu0 0
        %1652 = vmatpush1.bf16.msra.mxu0 0
        %1653 = vmatprep.subr.bf16.mxu0 0
        %1654 = vmatpush1.bf16.msra.mxu0 0
        %1655 = vmatprep.subr.bf16.mxu0 0
        %1656 = vmatpush1.bf16.msra.mxu0 0
        %1657 = vmatprep.subr.bf16.mxu0 0
        %1658 = vmatpush1.bf16.msra.mxu0 0
        %1659 = vmatprep.subr.bf16.mxu0 0
        %1660 = vmatpush1.bf16.msra.mxu0 0
        %1661 = vmatprep.subr.bf16.mxu0 0
        %1662 = vmatpush1.bf16.msra.mxu0 0
        %1663 = vmatprep.subr.bf16.mxu0 0
        %1664 = vmatpush1.bf16.msra.mxu0 0
        %1665 = vmatprep.subr.bf16.mxu0 0
        %1666 = vmatpush1.bf16.msra.mxu0 0
        %1667 = vmatprep.subr.bf16.mxu0 0
        %1668 = vmatpush1.bf16.msra.mxu0 0
        %1669 = vmatprep.subr.bf16.mxu0 0
        %1670 = vmatpush1.bf16.msra.mxu0 0
        %1671 = vmatprep.mubr.bf16.mxu0 0
        %1672 = vmatmul.mubr.bf16.gmra.mrb[0].mxu0 %v1630
        %v1673 = vpop.f32.mrb[0].mxu0
        %v1674 = vadd.f32 %v1626, %v1673
        %v1675 = vpop.f32.mrb[0].mxu0
        %v1676 = vadd.f32 %v1626, %v1675
        %v1677 = vpop.f32.mrb[0].mxu0
        %v1678 = vpop.f32.mrb[0].mxu0
        %1679 = vdwg.mxu0
        %1680 = vst [vmem:[%s333] sm:$0xff] %v1674
        %1681 = vst [vmem:[%s333 + $0x8] sm:$0xff] %v1676
        %s1682 = sand.u32 %s192, 1
        %s1683 = scalar_lea.sflag [#allocation4], %s1682
        %s1684 = sand.u32 %s192, 1
        %s1685 = smul.addr %s1684, 16
        %s1686 = scalar_lea.vmem [#allocation5], %s1685
        // Predicated region
        $region49: #{tpu_custom_call.1} parent=43 // pred_check
          %p1687 = pneg %p202
        $region50: #{tpu_custom_call.1} parent=43 // pred_check_branch
          %1689 = sbr.rel (%p1687) target = $region52
        $region51: #{tpu_custom_call.1} parent=43 // pred_region
          %s1690 = smul.u32 2, %s28
          %s1692 = ssub.s32 256, 256
          %1693 = vsyncadd %s1683, %s1692
          %s1694 = smul.addr %s27, 2
          %s1695 = sadd.s32 %s1690, %s1694
          %s1696 = smul.addr %s1695, 128
          %s1697 = scalar_lea.hbm %s6, %s1696
          %s1699 = sshll.u32 %s1686, 4
          %s1700 = int_to_ptr.vmem [resolvable:$true] %s1699
          %1702 = dma.vmem_to_hbm [thread:$0]  %s1700, 256, %s1697, %s1683
        $region52: #{tpu_custom_call.1} parent=43 // pred_fallthru
          _
      $region44: #{tpu_custom_call.1} parent=5 // pred_fallthru
        _
      %p1703 = scmp.le.s32.totalorder 2, %s18
      // Predicated region
      $region53: #{tpu_custom_call.1} parent=5 // pred_check
        %p1704 = pneg %p1703
      $region54: #{tpu_custom_call.1} parent=5 // pred_check_branch
        %1706 = sbr.rel (%p1704) target = $region56
      $region55: #{tpu_custom_call.1} parent=5 // pred_region
        %s1707 = ssub.s32 %s18, 2
        // Predicated region
        $region57: #{tpu_custom_call.1} parent=55 // pred_check
          %p1708 = pneg %p208
        $region58: #{tpu_custom_call.1} parent=55 // pred_check_branch
          %1710 = sbr.rel (%p1708) target = $region60
        $region59: #{tpu_custom_call.1} parent=55 // pred_region
          %s1711 = sand.u32 %s193, 1
          %s1712 = scalar_lea.sflag [#allocation4], %s1711
          %s1713 = sand.u32 %s193, 1
          %s1714 = smul.addr %s1713, 16
          %s1715 = scalar_lea.vmem [#allocation5], %s1714
          %1716 = dma.done %s1712, 256
        $region60: #{tpu_custom_call.1} parent=55 // pred_fallthru
          _
      $region56: #{tpu_custom_call.1} parent=5 // pred_fallthru
        _
    $region6: #{tpu_custom_call.1} parent=1 // loop_footer
      %s22 = sadd.s32 1, %s18
    $region7: #{tpu_custom_call.1} parent=1 // loop_footer_branch
      %17 = sbr.rel target = $region3
    $region8: #{tpu_custom_call.1} parent=1 // loop_exit
      _
    %1717 = vsyncpa [#allocation3], 1
    %s1718 = scalar_lea.sflag [#allocation3], 1
    %1719 = vsyncpa %s1718, 1
    %1720 = vsyncpa [#allocation4], 1
    %s1721 = scalar_lea.sflag [#allocation4], 1
    %1722 = vsyncpa %s1721, 1

</llo_original>
